<compile_context>
chip_gen: v7x
topology: tpu7x:2x2x1
jax: 0.10.0
libtpu: 0.0.40
codegen_flags: <defaults>
</compile_context>

<pallas_src>
import math
from functools import partial

import jax
import jax.numpy as jnp
from jax.experimental import pallas as pl
from jax.experimental.pallas import tpu as pltpu

_BN_EPS = 1e-5


# ----------------------------------------------------------------------------
# In-kernel helper: 3x3 circular conv as a single im2col matmul
# ----------------------------------------------------------------------------
def _conv3x3_circular(x4d, w):
    """3x3 cross-correlation with circular padding, as ONE MXU matmul.

    x4d: (N, H, W, C) f32 value already resident in VMEM/registers.
    w  : (9*C, F) f32 value, flattened from (3, 3, C, F) -> ((dy*3+dx)*C + c, F).
    returns: (N*H*W, F) f32.
    """
    N, H, W, C = x4d.shape
    # Circular pad by 1 along W (second-minor dim) and H (major dim).
    xw = jnp.concatenate([x4d[:, :, W - 1:W, :], x4d, x4d[:, :, 0:1, :]], axis=2)
    xp = jnp.concatenate([xw[:, H - 1:H, :, :], xw, xw[:, 0:1, :, :]], axis=1)
    # im2col: gather the 3 dx-shifts, then the 3 dy-shifts, along the lane axis,
    # giving a (dy, dx, c) minor ordering that matches w's layout.
    cols = jnp.concatenate([xp[:, :, dx:dx + W, :] for dx in range(3)], axis=-1)
    taps = jnp.concatenate([cols[:, dy:dy + H, :, :] for dy in range(3)], axis=-1)
    patches = taps.reshape(N * H * W, 9 * C)
    return jnp.dot(patches, w, preferred_element_type=jnp.float32)


# ----------------------------------------------------------------------------
# Fused Block kernel: MaxPool2d(2,2) -> (conv+BN+ReLU) -> (conv+BN+ReLU)
# ----------------------------------------------------------------------------
def _block_kernel(x_ref, w1_ref, g1_ref, b1_ref, w2_ref, g2_ref, b2_ref, o_ref,
                  *, pool):
    F = w1_ref.shape[-1]

    x = x_ref[...].astype(jnp.float32)
    if pool:
        # x_ref is (N, H, Wo, 2*Cin): the two W-neighbours of every 2x2 window live
        # in the folded channel axis (a free bitcast done in the wrapper); the two
        # H-neighbours are separated with a cheap major-dim reshape.
        N, H, Wo, C2 = x.shape
        Cin = C2 // 2
        Ho = H // 2
        mw = jnp.maximum(x[..., :Cin], x[..., Cin:])          # max over W pairs
        mh = mw.reshape(N, Ho, 2, Wo, Cin)
        xin = jnp.maximum(mh[:, :, 0], mh[:, :, 1])           # max over H pairs
    else:
        N, Ho, Wo, Cin = x.shape
        xin = x

    rows = N * Ho * Wo
    inv_n = 1.0 / rows

    # --- ConvLayer 1: conv (bias cancels under training-mode BN and is dropped),
    #     BatchNorm2d with one-pass biased batch stats, ReLU.
    a1 = _conv3x3_circular(xin, w1_ref[...])                  # (rows, F) f32
    m1 = jnp.sum(a1, axis=0, keepdims=True) * inv_n           # (1, F)
    q1 = jnp.sum(a1 * a1, axis=0, keepdims=True) * inv_n
    inv_std1 = jax.lax.rsqrt(q1 - m1 * m1 + _BN_EPS)
    y1 = jnp.maximum((a1 - m1) * (inv_std1 * g1_ref[...]) + b1_ref[...], 0.0)

    # --- ConvLayer 2: same, but BN/ReLU run on the transposed (F, rows) accumulator
    #     so the final store is lane-dense (rows is a multiple of 128 here).
    a2 = _conv3x3_circular(y1.reshape(N, Ho, Wo, F), w2_ref[...])   # (rows, F)
    a2t = jnp.transpose(a2)                                   # (F, rows)
    m2 = jnp.sum(a2t, axis=1, keepdims=True) * inv_n          # (F, 1)
    q2 = jnp.sum(a2t * a2t, axis=1, keepdims=True) * inv_n
    inv_std2 = jax.lax.rsqrt(q2 - m2 * m2 + _BN_EPS)
    y2t = jnp.maximum((a2t - m2) * (inv_std2 * g2_ref[...]) + b2_ref[...], 0.0)

    o_ref[...] = y2t.astype(o_ref.dtype)
    # TODO(synk): BN running_mean/running_var buffer updates (a training-time side
    # effect that does not influence this forward output) are not materialized.


# ----------------------------------------------------------------------------
# Block forward (NCHW in / NCHW out, matching the PyTorch module)
# ----------------------------------------------------------------------------
def block_forward(params, x_nchw, b_type="down_sample"):
    x = jnp.transpose(x_nchw, (0, 2, 3, 1)).astype(jnp.float32)   # NCHW -> NHWC once
    N, H, W, Cin = x.shape
    pool = b_type in ("down_sample", "bottleneck")
    if pool:
        assert H % 2 == 0 and W % 2 == 0, "MaxPool2d(2,2) requires even H and W"
        Ho, Wo = H // 2, W // 2
        x_in = x.reshape(N, H, Wo, 2 * Cin)   # free bitcast; kernel folds the 2x2 max
    else:
        Ho, Wo = H, W
        x_in = x

    p1, p2 = params["conv1"], params["conv2"]
    feats = p1["w"].shape[-1]
    rows = N * Ho * Wo

    # NOTE: conv biases p1["b"] / p2["b"] are intentionally NOT passed to the
    # kernel: under training-mode BatchNorm they cancel exactly in the mean
    # subtraction, so they never influence the forward output.
    out = pl.pallas_call(
        partial(_block_kernel, pool=pool),
        out_shape=jax.ShapeDtypeStruct((feats, rows), jnp.float32),
        compiler_params=pltpu.CompilerParams(vmem_limit_bytes=32 * 1024 * 1024),
    )(
        x_in,
        p1["w"].reshape(9 * Cin, feats),          # im2col weight layout (free reshape)
        p1["gamma"].reshape(1, feats),
        p1["beta"].reshape(1, feats),
        p2["w"].reshape(9 * feats, feats),
        p2["gamma"].reshape(feats, 1),
        p2["beta"].reshape(feats, 1),
    )
    # (F, N*Ho*Wo) -> (N, F, Ho, Wo) == NCHW
    return jnp.transpose(out.reshape(feats, N, Ho, Wo), (1, 0, 2, 3))


# ----------------------------------------------------------------------------
# Parameter init (deterministic; matches the PyTorch init schemes)
# ----------------------------------------------------------------------------
def init_conv_layer_params(key, cin, cout):
    kw, kb = jax.random.split(key)
    fan_in, fan_out = cin * 9, cout * 9
    bound_w = math.sqrt(6.0 / (fan_in + fan_out))            # xavier_uniform_
    w = jax.random.uniform(kw, (3, 3, cin, cout), jnp.float32, -bound_w, bound_w)
    bound_b = 1.0 / math.sqrt(fan_in)                        # Conv2d default bias init
    b = jax.random.uniform(kb, (cout,), jnp.float32, -bound_b, bound_b)
    gamma = jnp.ones((cout,), jnp.float32)                   # BatchNorm2d defaults
    beta = jnp.zeros((cout,), jnp.float32)
    return dict(w=w, b=b, gamma=gamma, beta=beta)


def init_block_params(key, in_channels, features):
    k1, k2 = jax.random.split(key)
    return dict(conv1=init_conv_layer_params(k1, in_channels, features),
                conv2=init_conv_layer_params(k2, features, features))


if __name__ == "__main__":
    key = jax.random.PRNGKey(0)
    k_params, k_x = jax.random.split(key)

    in_channels, features = 4, 8
    params = init_block_params(k_params, in_channels, features)

    # NCHW input, matching the PyTorch module's convention
    x = jax.random.normal(k_x, (2, in_channels, 16, 16), jnp.float32)

    fwd = jax.jit(partial(block_forward, b_type="down_sample"))
    out = fwd(params, x)
    jax.block_until_ready(out)

    assert out.shape == (2, features, 8, 8), out.shape
    assert out.dtype == jnp.float32
    assert bool(jnp.all(out >= 0.0))          # ReLU output
    assert bool(jnp.all(jnp.isfinite(out)))
    print("KERNEL_OK")
</pallas_src>

<mosaic_0001>
module attributes {stable_mosaic.version = 11 : i64} {
  func.func @_block_kernel(%arg0: memref<2x16x8x8xf32, #tpu.memory_space<vmem>>, %arg1: memref<36x8xf32, #tpu.memory_space<vmem>>, %arg2: memref<1x8xf32, #tpu.memory_space<vmem>>, %arg3: memref<1x8xf32, #tpu.memory_space<vmem>>, %arg4: memref<72x8xf32, #tpu.memory_space<vmem>>, %arg5: memref<8x1xf32, #tpu.memory_space<vmem>>, %arg6: memref<8x1xf32, #tpu.memory_space<vmem>>, %arg7: memref<8x128xf32, #tpu.memory_space<vmem>>) attributes {dimension_semantics = [], scalar_prefetch = 0 : i64, scratch_operands = 0 : i64, tpu.core_type = #tpu.core_type<tc>} {
    %c0 = arith.constant 0 : index
    %c0_0 = arith.constant 0 : index
    %c0_1 = arith.constant 0 : index
    %c0_2 = arith.constant 0 : index
    %0 = vector.load %arg0[%c0, %c0_0, %c0_1, %c0_2] : memref<2x16x8x8xf32, #tpu.memory_space<vmem>>, vector<2x16x8x8xf32>
    %1 = vector.extract_strided_slice %0 {offsets = [0, 0, 0, 0], sizes = [2, 16, 8, 4], strides = [1, 1, 1, 1]} : vector<2x16x8x8xf32> to vector<2x16x8x4xf32>
    %2 = vector.extract_strided_slice %0 {offsets = [0, 0, 0, 4], sizes = [2, 16, 8, 4], strides = [1, 1, 1, 1]} : vector<2x16x8x8xf32> to vector<2x16x8x4xf32>
    %3 = arith.maximumf %1, %2 : vector<2x16x8x4xf32>
    %4 = vector.shape_cast %3 : vector<2x16x8x4xf32> to vector<2x8x2x8x4xf32>
    %5 = vector.extract_strided_slice %4 {offsets = [0, 0, 0, 0, 0], sizes = [2, 8, 1, 8, 4], strides = [1, 1, 1, 1, 1]} : vector<2x8x2x8x4xf32> to vector<2x8x1x8x4xf32>
    %6 = vector.shape_cast %5 : vector<2x8x1x8x4xf32> to vector<2x8x8x4xf32>
    %7 = vector.extract_strided_slice %4 {offsets = [0, 0, 1, 0, 0], sizes = [2, 8, 1, 8, 4], strides = [1, 1, 1, 1, 1]} : vector<2x8x2x8x4xf32> to vector<2x8x1x8x4xf32>
    %8 = vector.shape_cast %7 : vector<2x8x1x8x4xf32> to vector<2x8x8x4xf32>
    %9 = arith.maximumf %6, %8 : vector<2x8x8x4xf32>
    %c0_3 = arith.constant 0 : index
    %c0_4 = arith.constant 0 : index
    %10 = vector.load %arg1[%c0_3, %c0_4] : memref<36x8xf32, #tpu.memory_space<vmem>>, vector<36x8xf32>
    %11 = vector.extract_strided_slice %9 {offsets = [0, 0, 7, 0], sizes = [2, 8, 1, 4], strides = [1, 1, 1, 1]} : vector<2x8x8x4xf32> to vector<2x8x1x4xf32>
    %12 = vector.extract_strided_slice %9 {offsets = [0, 0, 0, 0], sizes = [2, 8, 1, 4], strides = [1, 1, 1, 1]} : vector<2x8x8x4xf32> to vector<2x8x1x4xf32>
    %13 = tpu.concatenate %11, %9, %12 in 2 : vector<2x8x1x4xf32>, vector<2x8x8x4xf32>, vector<2x8x1x4xf32> -> vector<2x8x10x4xf32>
    %14 = vector.extract_strided_slice %13 {offsets = [0, 7, 0, 0], sizes = [2, 1, 10, 4], strides = [1, 1, 1, 1]} : vector<2x8x10x4xf32> to vector<2x1x10x4xf32>
    %15 = vector.extract_strided_slice %13 {offsets = [0, 0, 0, 0], sizes = [2, 1, 10, 4], strides = [1, 1, 1, 1]} : vector<2x8x10x4xf32> to vector<2x1x10x4xf32>
    %16 = tpu.concatenate %14, %13, %15 in 1 : vector<2x1x10x4xf32>, vector<2x8x10x4xf32>, vector<2x1x10x4xf32> -> vector<2x10x10x4xf32>
    %17 = vector.extract_strided_slice %16 {offsets = [0, 0, 0, 0], sizes = [2, 10, 8, 4], strides = [1, 1, 1, 1]} : vector<2x10x10x4xf32> to vector<2x10x8x4xf32>
    %18 = vector.extract_strided_slice %16 {offsets = [0, 0, 1, 0], sizes = [2, 10, 8, 4], strides = [1, 1, 1, 1]} : vector<2x10x10x4xf32> to vector<2x10x8x4xf32>
    %19 = vector.extract_strided_slice %16 {offsets = [0, 0, 2, 0], sizes = [2, 10, 8, 4], strides = [1, 1, 1, 1]} : vector<2x10x10x4xf32> to vector<2x10x8x4xf32>
    %20 = tpu.concatenate %17, %18, %19 in 3 : vector<2x10x8x4xf32>, vector<2x10x8x4xf32>, vector<2x10x8x4xf32> -> vector<2x10x8x12xf32>
    %21 = vector.extract_strided_slice %20 {offsets = [0, 0, 0, 0], sizes = [2, 8, 8, 12], strides = [1, 1, 1, 1]} : vector<2x10x8x12xf32> to vector<2x8x8x12xf32>
    %22 = vector.extract_strided_slice %20 {offsets = [0, 1, 0, 0], sizes = [2, 8, 8, 12], strides = [1, 1, 1, 1]} : vector<2x10x8x12xf32> to vector<2x8x8x12xf32>
    %23 = vector.extract_strided_slice %20 {offsets = [0, 2, 0, 0], sizes = [2, 8, 8, 12], strides = [1, 1, 1, 1]} : vector<2x10x8x12xf32> to vector<2x8x8x12xf32>
    %24 = tpu.concatenate %21, %22, %23 in 3 : vector<2x8x8x12xf32>, vector<2x8x8x12xf32>, vector<2x8x8x12xf32> -> vector<2x8x8x36xf32>
    %25 = vector.shape_cast %24 : vector<2x8x8x36xf32> to vector<128x36xf32>
    %cst = arith.constant dense<0.000000e+00> : vector<128x8xf32>
    %26 = tpu.matmul %25, %10, %cst {dimension_numbers = #tpu.dot_dimension_numbers<[1], [0], [0], [1], [0, 0, 1, 1], [], []>} : vector<128x36xf32>, vector<36x8xf32>, vector<128x8xf32> -> vector<128x8xf32>
    %cst_5 = arith.constant dense<0.000000e+00> : vector<8xf32>
    %27 = vector.multi_reduction <add>, %26, %cst_5 [0] : vector<128x8xf32> to vector<8xf32>
    %28 = vector.shape_cast %27 : vector<8xf32> to vector<1x8xf32>
    %cst_6 = arith.constant 7.812500e-03 : f32
    %29 = vector.broadcast %cst_6 : f32 to vector<1x8xf32>
    %30 = arith.mulf %28, %29 : vector<1x8xf32>
    %31 = arith.mulf %26, %26 : vector<128x8xf32>
    %cst_7 = arith.constant dense<0.000000e+00> : vector<8xf32>
    %32 = vector.multi_reduction <add>, %31, %cst_7 [0] : vector<128x8xf32> to vector<8xf32>
    %33 = vector.shape_cast %32 : vector<8xf32> to vector<1x8xf32>
    %cst_8 = arith.constant 7.812500e-03 : f32
    %34 = vector.broadcast %cst_8 : f32 to vector<1x8xf32>
    %35 = arith.mulf %33, %34 : vector<1x8xf32>
    %36 = arith.mulf %30, %30 : vector<1x8xf32>
    %37 = arith.subf %35, %36 : vector<1x8xf32>
    %cst_9 = arith.constant 9.99999974E-6 : f32
    %38 = vector.broadcast %cst_9 : f32 to vector<1x8xf32>
    %39 = arith.addf %37, %38 : vector<1x8xf32>
    %40 = math.rsqrt %39 : vector<1x8xf32>
    %41 = vector.broadcast %30 : vector<1x8xf32> to vector<128x8xf32>
    %42 = arith.subf %26, %41 : vector<128x8xf32>
    %c0_10 = arith.constant 0 : index
    %c0_11 = arith.constant 0 : index
    %43 = vector.load %arg2[%c0_10, %c0_11] : memref<1x8xf32, #tpu.memory_space<vmem>>, vector<1x8xf32>
    %44 = arith.mulf %40, %43 : vector<1x8xf32>
    %45 = vector.broadcast %44 : vector<1x8xf32> to vector<128x8xf32>
    %46 = arith.mulf %42, %45 : vector<128x8xf32>
    %c0_12 = arith.constant 0 : index
    %c0_13 = arith.constant 0 : index
    %47 = vector.load %arg3[%c0_12, %c0_13] : memref<1x8xf32, #tpu.memory_space<vmem>>, vector<1x8xf32>
    %48 = vector.broadcast %47 : vector<1x8xf32> to vector<128x8xf32>
    %49 = arith.addf %46, %48 : vector<128x8xf32>
    %cst_14 = arith.constant 0.000000e+00 : f32
    %50 = vector.broadcast %cst_14 : f32 to vector<128x8xf32>
    %51 = arith.maximumf %49, %50 : vector<128x8xf32>
    %52 = vector.shape_cast %51 : vector<128x8xf32> to vector<2x8x8x8xf32>
    %c0_15 = arith.constant 0 : index
    %c0_16 = arith.constant 0 : index
    %53 = vector.load %arg4[%c0_15, %c0_16] : memref<72x8xf32, #tpu.memory_space<vmem>>, vector<72x8xf32>
    %54 = vector.extract_strided_slice %52 {offsets = [0, 0, 7, 0], sizes = [2, 8, 1, 8], strides = [1, 1, 1, 1]} : vector<2x8x8x8xf32> to vector<2x8x1x8xf32>
    %55 = vector.extract_strided_slice %52 {offsets = [0, 0, 0, 0], sizes = [2, 8, 1, 8], strides = [1, 1, 1, 1]} : vector<2x8x8x8xf32> to vector<2x8x1x8xf32>
    %56 = tpu.concatenate %54, %52, %55 in 2 : vector<2x8x1x8xf32>, vector<2x8x8x8xf32>, vector<2x8x1x8xf32> -> vector<2x8x10x8xf32>
    %57 = vector.extract_strided_slice %56 {offsets = [0, 7, 0, 0], sizes = [2, 1, 10, 8], strides = [1, 1, 1, 1]} : vector<2x8x10x8xf32> to vector<2x1x10x8xf32>
    %58 = vector.extract_strided_slice %56 {offsets = [0, 0, 0, 0], sizes = [2, 1, 10, 8], strides = [1, 1, 1, 1]} : vector<2x8x10x8xf32> to vector<2x1x10x8xf32>
    %59 = tpu.concatenate %57, %56, %58 in 1 : vector<2x1x10x8xf32>, vector<2x8x10x8xf32>, vector<2x1x10x8xf32> -> vector<2x10x10x8xf32>
    %60 = vector.extract_strided_slice %59 {offsets = [0, 0, 0, 0], sizes = [2, 10, 8, 8], strides = [1, 1, 1, 1]} : vector<2x10x10x8xf32> to vector<2x10x8x8xf32>
    %61 = vector.extract_strided_slice %59 {offsets = [0, 0, 1, 0], sizes = [2, 10, 8, 8], strides = [1, 1, 1, 1]} : vector<2x10x10x8xf32> to vector<2x10x8x8xf32>
    %62 = vector.extract_strided_slice %59 {offsets = [0, 0, 2, 0], sizes = [2, 10, 8, 8], strides = [1, 1, 1, 1]} : vector<2x10x10x8xf32> to vector<2x10x8x8xf32>
    %63 = tpu.concatenate %60, %61, %62 in 3 : vector<2x10x8x8xf32>, vector<2x10x8x8xf32>, vector<2x10x8x8xf32> -> vector<2x10x8x24xf32>
    %64 = vector.extract_strided_slice %63 {offsets = [0, 0, 0, 0], sizes = [2, 8, 8, 24], strides = [1, 1, 1, 1]} : vector<2x10x8x24xf32> to vector<2x8x8x24xf32>
    %65 = vector.extract_strided_slice %63 {offsets = [0, 1, 0, 0], sizes = [2, 8, 8, 24], strides = [1, 1, 1, 1]} : vector<2x10x8x24xf32> to vector<2x8x8x24xf32>
    %66 = vector.extract_strided_slice %63 {offsets = [0, 2, 0, 0], sizes = [2, 8, 8, 24], strides = [1, 1, 1, 1]} : vector<2x10x8x24xf32> to vector<2x8x8x24xf32>
    %67 = tpu.concatenate %64, %65, %66 in 3 : vector<2x8x8x24xf32>, vector<2x8x8x24xf32>, vector<2x8x8x24xf32> -> vector<2x8x8x72xf32>
    %68 = vector.shape_cast %67 : vector<2x8x8x72xf32> to vector<128x72xf32>
    %cst_17 = arith.constant dense<0.000000e+00> : vector<128x8xf32>
    %69 = tpu.matmul %68, %53, %cst_17 {dimension_numbers = #tpu.dot_dimension_numbers<[1], [0], [0], [1], [0, 0, 1, 1], [], []>} : vector<128x72xf32>, vector<72x8xf32>, vector<128x8xf32> -> vector<128x8xf32>
    %70 = tpu.transpose %69, [1, 0] : vector<128x8xf32> -> vector<8x128xf32>
    %cst_18 = arith.constant dense<0.000000e+00> : vector<8xf32>
    %71 = vector.multi_reduction <add>, %70, %cst_18 [1] : vector<8x128xf32> to vector<8xf32>
    %72 = vector.shape_cast %71 : vector<8xf32> to vector<8x1xf32>
    %cst_19 = arith.constant 7.812500e-03 : f32
    %73 = vector.broadcast %cst_19 : f32 to vector<8x1xf32>
    %74 = arith.mulf %72, %73 : vector<8x1xf32>
    %75 = arith.mulf %70, %70 : vector<8x128xf32>
    %cst_20 = arith.constant dense<0.000000e+00> : vector<8xf32>
    %76 = vector.multi_reduction <add>, %75, %cst_20 [1] : vector<8x128xf32> to vector<8xf32>
    %77 = vector.shape_cast %76 : vector<8xf32> to vector<8x1xf32>
    %cst_21 = arith.constant 7.812500e-03 : f32
    %78 = vector.broadcast %cst_21 : f32 to vector<8x1xf32>
    %79 = arith.mulf %77, %78 : vector<8x1xf32>
    %80 = arith.mulf %74, %74 : vector<8x1xf32>
    %81 = arith.subf %79, %80 : vector<8x1xf32>
    %cst_22 = arith.constant 9.99999974E-6 : f32
    %82 = vector.broadcast %cst_22 : f32 to vector<8x1xf32>
    %83 = arith.addf %81, %82 : vector<8x1xf32>
    %84 = math.rsqrt %83 : vector<8x1xf32>
    %85 = vector.broadcast %74 : vector<8x1xf32> to vector<8x128xf32>
    %86 = arith.subf %70, %85 : vector<8x128xf32>
    %c0_23 = arith.constant 0 : index
    %c0_24 = arith.constant 0 : index
    %87 = vector.load %arg5[%c0_23, %c0_24] : memref<8x1xf32, #tpu.memory_space<vmem>>, vector<8x1xf32>
    %88 = arith.mulf %84, %87 : vector<8x1xf32>
    %89 = vector.broadcast %88 : vector<8x1xf32> to vector<8x128xf32>
    %90 = arith.mulf %86, %89 : vector<8x128xf32>
    %c0_25 = arith.constant 0 : index
    %c0_26 = arith.constant 0 : index
    %91 = vector.load %arg6[%c0_25, %c0_26] : memref<8x1xf32, #tpu.memory_space<vmem>>, vector<8x1xf32>
    %92 = vector.broadcast %91 : vector<8x1xf32> to vector<8x128xf32>
    %93 = arith.addf %90, %92 : vector<8x128xf32>
    %cst_27 = arith.constant 0.000000e+00 : f32
    %94 = vector.broadcast %cst_27 : f32 to vector<8x128xf32>
    %95 = arith.maximumf %93, %94 : vector<8x128xf32>
    %c0_28 = arith.constant 0 : index
    %c0_29 = arith.constant 0 : index
    %96 = vector.load %arg7[%c0_28, %c0_29] : memref<8x128xf32, #tpu.memory_space<vmem>>, vector<8x128xf32>
    tpu.vector_store %arg7[%c0_28, %c0_29], %95 {strides = array<i32>} : memref<8x128xf32, #tpu.memory_space<vmem>>, vector<8x128xf32>,
    return
  }
}

</mosaic_0001>

<llo_original>
// kernel: block_forward.1
$region0: #{block_forward.1}
  #allocation0 [shape = 'u32[]', space=smem, size = 0x4, offset = 0x4, fixed_abs, tag = 'smem constant byte address 0x4 - core index']
  #allocation1 [shape = 'u32[144,128]{1,0:T(1,128)}', space=vmem, size = 0x12000, scoped, tag = 'internal scratch']
  %s0 = inlined_call_operand.vmem [shape: f32[2,16,8,8], index: 0, kind: input, shape index: {}]
  %s1 = inlined_call_operand.vmem [shape: f32[36,8], index: 1, kind: input, shape index: {}]
  %s2 = inlined_call_operand.vmem [shape: f32[1,8], index: 2, kind: input, shape index: {}]
  %s3 = inlined_call_operand.vmem [shape: f32[1,8], index: 3, kind: input, shape index: {}]
  %s4 = inlined_call_operand.vmem [shape: f32[72,8], index: 4, kind: input, shape index: {}]
  %s5 = inlined_call_operand.vmem [shape: f32[8,1], index: 5, kind: input, shape index: {}]
  %s6 = inlined_call_operand.vmem [shape: f32[8,1], index: 6, kind: input, shape index: {}]
  %s7 = inlined_call_operand.vmem [shape: f32[8,128], index: 7, kind: output, shape index: {}]
  %s8 = sld [smem:[#allocation0]]
  $region38: #{block_forward.1} parent=0
    _
  %s10 = ssub.s32 1, %s8
  %s11 = scalar_select 0, %s10, %s8
  // Predicated region
  $region2: #{block_forward.1} parent=0 // pred_check
    _
  $region3: #{block_forward.1} parent=0 // pred_check_branch
    %13 = sbr.rel (0) target = $region5
  $region4: #{block_forward.1} parent=0 // pred_region
    _
  $region5: #{block_forward.1} parent=0 // pred_fallthru
    _
  // Predicated region
  $region6: #{block_forward.1} parent=0 // pred_check
    _
  $region7: #{block_forward.1} parent=0 // pred_check_branch
    %15 = sbr.rel (0) target = $region9
  $region8: #{block_forward.1} parent=0 // pred_region
    _
  $region9: #{block_forward.1} parent=0 // pred_fallthru
    _
  // Predicated region
  $region10: #{block_forward.1} parent=0 // pred_check
    _
  $region11: #{block_forward.1} parent=0 // pred_check_branch
    %17 = sbr.rel (0) target = $region13
  $region12: #{block_forward.1} parent=0 // pred_region
    _
  $region13: #{block_forward.1} parent=0 // pred_fallthru
    _
  // Predicated region
  $region14: #{block_forward.1} parent=0 // pred_check
    _
  $region15: #{block_forward.1} parent=0 // pred_check_branch
    %19 = sbr.rel (0) target = $region17
  $region16: #{block_forward.1} parent=0 // pred_region
    _
  $region17: #{block_forward.1} parent=0 // pred_fallthru
    _
  // Predicated region
  $region18: #{block_forward.1} parent=0 // pred_check
    _
  $region19: #{block_forward.1} parent=0 // pred_check_branch
    %21 = sbr.rel (0) target = $region21
  $region20: #{block_forward.1} parent=0 // pred_region
    _
  $region21: #{block_forward.1} parent=0 // pred_fallthru
    _
  // Predicated region
  $region22: #{block_forward.1} parent=0 // pred_check
    _
  $region23: #{block_forward.1} parent=0 // pred_check_branch
    %23 = sbr.rel (0) target = $region25
  $region24: #{block_forward.1} parent=0 // pred_region
    _
  $region25: #{block_forward.1} parent=0 // pred_fallthru
    _
  // Predicated region
  $region26: #{block_forward.1} parent=0 // pred_check
    _
  $region27: #{block_forward.1} parent=0 // pred_check_branch
    %25 = sbr.rel (0) target = $region29
  $region28: #{block_forward.1} parent=0 // pred_region
    _
  $region29: #{block_forward.1} parent=0 // pred_fallthru
    _
  %v26 = vld [vmem:[%s0] sm:$0xff]
  %v27 = vld [vmem:[%s0 + $0x8] sm:$0xff]
  %v28 = vld [vmem:[%s0 + $0x10] sm:$0xff]
  %v29 = vld [vmem:[%s0 + $0x18] sm:$0xff]
  %v30 = vld [vmem:[%s0 + $0x20] sm:$0xff]
  %v31 = vld [vmem:[%s0 + $0x28] sm:$0xff]
  %v32 = vld [vmem:[%s0 + $0x30] sm:$0xff]
  %v33 = vld [vmem:[%s0 + $0x38] sm:$0xff]
  %v34 = vld [vmem:[%s0 + $0x40] sm:$0xff]
  %v35 = vld [vmem:[%s0 + $0x48] sm:$0xff]
  %v36 = vld [vmem:[%s0 + $0x50] sm:$0xff]
  %v37 = vld [vmem:[%s0 + $0x58] sm:$0xff]
  %v38 = vld [vmem:[%s0 + $0x60] sm:$0xff]
  %v39 = vld [vmem:[%s0 + $0x68] sm:$0xff]
  %v40 = vld [vmem:[%s0 + $0x70] sm:$0xff]
  %v41 = vld [vmem:[%s0 + $0x78] sm:$0xff]
  %v42 = vld [vmem:[%s0 + $0x80] sm:$0xff]
  %v43 = vld [vmem:[%s0 + $0x88] sm:$0xff]
  %v44 = vld [vmem:[%s0 + $0x90] sm:$0xff]
  %v45 = vld [vmem:[%s0 + $0x98] sm:$0xff]
  %v46 = vld [vmem:[%s0 + $0xa0] sm:$0xff]
  %v47 = vld [vmem:[%s0 + $0xa8] sm:$0xff]
  %v48 = vld [vmem:[%s0 + $0xb0] sm:$0xff]
  %v49 = vld [vmem:[%s0 + $0xb8] sm:$0xff]
  %v50 = vld [vmem:[%s0 + $0xc0] sm:$0xff]
  %v51 = vld [vmem:[%s0 + $0xc8] sm:$0xff]
  %v52 = vld [vmem:[%s0 + $0xd0] sm:$0xff]
  %v53 = vld [vmem:[%s0 + $0xd8] sm:$0xff]
  %v54 = vld [vmem:[%s0 + $0xe0] sm:$0xff]
  %v55 = vld [vmem:[%s0 + $0xe8] sm:$0xff]
  %v56 = vld [vmem:[%s0 + $0xf0] sm:$0xff]
  %v57 = vld [vmem:[%s0 + $0xf8] sm:$0xff]
  %90 = vrot.lane.b32.xlu0 %v26, 124
  %v91 = vpop.permute.xlu0 %90
  %92 = vrot.lane.b32.xlu0 %v27, 124
  %v93 = vpop.permute.xlu0 %92
  %94 = vrot.lane.b32.xlu0 %v28, 124
  %v95 = vpop.permute.xlu0 %94
  %96 = vrot.lane.b32.xlu0 %v29, 124
  %v97 = vpop.permute.xlu0 %96
  %98 = vrot.lane.b32.xlu0 %v30, 124
  %v99 = vpop.permute.xlu0 %98
  %100 = vrot.lane.b32.xlu0 %v31, 124
  %v101 = vpop.permute.xlu0 %100
  %102 = vrot.lane.b32.xlu0 %v32, 124
  %v103 = vpop.permute.xlu0 %102
  %104 = vrot.lane.b32.xlu0 %v33, 124
  %v105 = vpop.permute.xlu0 %104
  %106 = vrot.lane.b32.xlu0 %v34, 124
  %v107 = vpop.permute.xlu0 %106
  %108 = vrot.lane.b32.xlu0 %v35, 124
  %v109 = vpop.permute.xlu0 %108
  %110 = vrot.lane.b32.xlu0 %v36, 124
  %v111 = vpop.permute.xlu0 %110
  %112 = vrot.lane.b32.xlu0 %v37, 124
  %v113 = vpop.permute.xlu0 %112
  %114 = vrot.lane.b32.xlu0 %v38, 124
  %v115 = vpop.permute.xlu0 %114
  %116 = vrot.lane.b32.xlu0 %v39, 124
  %v117 = vpop.permute.xlu0 %116
  %118 = vrot.lane.b32.xlu0 %v40, 124
  %v119 = vpop.permute.xlu0 %118
  %120 = vrot.lane.b32.xlu0 %v41, 124
  %v121 = vpop.permute.xlu0 %120
  %122 = vrot.lane.b32.xlu0 %v42, 124
  %v123 = vpop.permute.xlu0 %122
  %124 = vrot.lane.b32.xlu0 %v43, 124
  %v125 = vpop.permute.xlu0 %124
  %126 = vrot.lane.b32.xlu0 %v44, 124
  %v127 = vpop.permute.xlu0 %126
  %128 = vrot.lane.b32.xlu0 %v45, 124
  %v129 = vpop.permute.xlu0 %128
  %130 = vrot.lane.b32.xlu0 %v46, 124
  %v131 = vpop.permute.xlu0 %130
  %132 = vrot.lane.b32.xlu0 %v47, 124
  %v133 = vpop.permute.xlu0 %132
  %134 = vrot.lane.b32.xlu0 %v48, 124
  %v135 = vpop.permute.xlu0 %134
  %136 = vrot.lane.b32.xlu0 %v49, 124
  %v137 = vpop.permute.xlu0 %136
  %138 = vrot.lane.b32.xlu0 %v50, 124
  %v139 = vpop.permute.xlu0 %138
  %140 = vrot.lane.b32.xlu0 %v51, 124
  %v141 = vpop.permute.xlu0 %140
  %142 = vrot.lane.b32.xlu0 %v52, 124
  %v143 = vpop.permute.xlu0 %142
  %144 = vrot.lane.b32.xlu0 %v53, 124
  %v145 = vpop.permute.xlu0 %144
  %146 = vrot.lane.b32.xlu0 %v54, 124
  %v147 = vpop.permute.xlu0 %146
  %148 = vrot.lane.b32.xlu0 %v55, 124
  %v149 = vpop.permute.xlu0 %148
  %150 = vrot.lane.b32.xlu0 %v56, 124
  %v151 = vpop.permute.xlu0 %150
  %152 = vrot.lane.b32.xlu0 %v57, 124
  %v153 = vpop.permute.xlu0 %152
  %v186 = vmax.f32 %v26, %v91
  %v187 = vmax.f32 %v27, %v93
  %v188 = vmax.f32 %v28, %v95
  %v189 = vmax.f32 %v29, %v97
  %v190 = vmax.f32 %v30, %v99
  %v191 = vmax.f32 %v31, %v101
  %v192 = vmax.f32 %v32, %v103
  %v193 = vmax.f32 %v33, %v105
  %v194 = vmax.f32 %v34, %v107
  %v195 = vmax.f32 %v35, %v109
  %v196 = vmax.f32 %v36, %v111
  %v197 = vmax.f32 %v37, %v113
  %v198 = vmax.f32 %v38, %v115
  %v199 = vmax.f32 %v39, %v117
  %v200 = vmax.f32 %v40, %v119
  %v201 = vmax.f32 %v41, %v121
  %v202 = vmax.f32 %v42, %v123
  %v203 = vmax.f32 %v43, %v125
  %v204 = vmax.f32 %v44, %v127
  %v205 = vmax.f32 %v45, %v129
  %v206 = vmax.f32 %v46, %v131
  %v207 = vmax.f32 %v47, %v133
  %v208 = vmax.f32 %v48, %v135
  %v209 = vmax.f32 %v49, %v137
  %v210 = vmax.f32 %v50, %v139
  %v211 = vmax.f32 %v51, %v141
  %v212 = vmax.f32 %v52, %v143
  %v213 = vmax.f32 %v53, %v145
  %v214 = vmax.f32 %v54, %v147
  %v215 = vmax.f32 %v55, %v149
  %v216 = vmax.f32 %v56, %v151
  %v217 = vmax.f32 %v57, %v153
  %v218 = vmax.f32 %v186, %v187
  %v219 = vmax.f32 %v188, %v189
  %v220 = vmax.f32 %v190, %v191
  %v221 = vmax.f32 %v192, %v193
  %v222 = vmax.f32 %v194, %v195
  %v223 = vmax.f32 %v196, %v197
  %v224 = vmax.f32 %v198, %v199
  %v225 = vmax.f32 %v200, %v201
  %v226 = vmax.f32 %v202, %v203
  %v227 = vmax.f32 %v204, %v205
  %v228 = vmax.f32 %v206, %v207
  %v229 = vmax.f32 %v208, %v209
  %v230 = vmax.f32 %v210, %v211
  %v231 = vmax.f32 %v212, %v213
  %v232 = vmax.f32 %v214, %v215
  %v233 = vmax.f32 %v216, %v217
  %v234 = vld [vmem:[%s1] sm:$0xff]
  %v235 = vld [vmem:[%s1 + $0x8] sm:$0xff]
  %v236 = vld [vmem:[%s1 + $0x10] sm:$0xff]
  %v237 = vld [vmem:[%s1 + $0x18] sm:$0xff]
  %v238 = vld [vmem:[%s1 + $0x20] sm:$0xf]
  %v255 = vrot.slane %v218, 7
  %v256 = vrot.slane %v219, 7
  %v257 = vrot.slane %v220, 7
  %v258 = vrot.slane %v221, 7
  %v259 = vrot.slane %v222, 7
  %v260 = vrot.slane %v223, 7
  %v261 = vrot.slane %v224, 7
  %v262 = vrot.slane %v225, 7
  %v263 = vrot.slane %v226, 7
  %v264 = vrot.slane %v227, 7
  %v265 = vrot.slane %v228, 7
  %v266 = vrot.slane %v229, 7
  %v267 = vrot.slane %v230, 7
  %v268 = vrot.slane %v231, 7
  %v269 = vrot.slane %v232, 7
  %v270 = vrot.slane %v233, 7
  %vm287 = vcmask 1040384
  %v288 = vsel %vm287, %v255, %v255
  %v289 = vsel %vm287, %v256, %v256
  %v290 = vsel %vm287, %v257, %v257
  %v291 = vsel %vm287, %v258, %v258
  %v292 = vsel %vm287, %v259, %v259
  %v293 = vsel %vm287, %v260, %v260
  %v294 = vsel %vm287, %v261, %v261
  %v295 = vsel %vm287, %v262, %v262
  %v296 = vsel %vm287, %v263, %v263
  %v297 = vsel %vm287, %v264, %v264
  %v298 = vsel %vm287, %v265, %v265
  %v299 = vsel %vm287, %v266, %v266
  %v300 = vsel %vm287, %v267, %v267
  %v301 = vsel %vm287, %v268, %v268
  %v302 = vsel %vm287, %v269, %v269
  %v303 = vsel %vm287, %v270, %v270
  %vm320 = vcmask 1046528
  %v321 = vrot.slane %v295, 1
  %v322 = vsel %vm320, %v321, %v321
  %v323 = vrot.slane %v288, 1
  %v324 = vsel %vm320, %v323, %v323
  %v325 = vrot.slane %v289, 1
  %v326 = vsel %vm320, %v325, %v325
  %v327 = vrot.slane %v290, 1
  %v328 = vsel %vm320, %v327, %v327
  %v329 = vrot.slane %v291, 1
  %v330 = vsel %vm320, %v329, %v329
  %v331 = vrot.slane %v292, 1
  %v332 = vsel %vm320, %v331, %v331
  %v333 = vrot.slane %v293, 1
  %v334 = vsel %vm320, %v333, %v333
  %v335 = vrot.slane %v294, 1
  %v336 = vsel %vm320, %v335, %v335
  %v337 = vrot.slane %v303, 1
  %v338 = vsel %vm320, %v337, %v337
  %v339 = vrot.slane %v296, 1
  %v340 = vsel %vm320, %v339, %v339
  %v341 = vrot.slane %v297, 1
  %v342 = vsel %vm320, %v341, %v341
  %v343 = vrot.slane %v298, 1
  %v344 = vsel %vm320, %v343, %v343
  %v345 = vrot.slane %v299, 1
  %v346 = vsel %vm320, %v345, %v345
  %v347 = vrot.slane %v300, 1
  %v348 = vsel %vm320, %v347, %v347
  %v349 = vrot.slane %v301, 1
  %v350 = vsel %vm320, %v349, %v349
  %v351 = vrot.slane %v302, 1
  %v352 = vsel %vm320, %v351, %v351
  %353 = vrot.lane.b32.xlu0 %v322, 4
  %v354 = vpop.permute.xlu0 %353
  %355 = vrot.lane.b32.xlu0 %v324, 4
  %v356 = vpop.permute.xlu0 %355
  %357 = vrot.lane.b32.xlu0 %v326, 4
  %v358 = vpop.permute.xlu0 %357
  %359 = vrot.lane.b32.xlu0 %v328, 4
  %v360 = vpop.permute.xlu0 %359
  %361 = vrot.lane.b32.xlu0 %v330, 4
  %v362 = vpop.permute.xlu0 %361
  %363 = vrot.lane.b32.xlu0 %v332, 4
  %v364 = vpop.permute.xlu0 %363
  %365 = vrot.lane.b32.xlu0 %v334, 4
  %v366 = vpop.permute.xlu0 %365
  %367 = vrot.lane.b32.xlu0 %v336, 4
  %v368 = vpop.permute.xlu0 %367
  %369 = vrot.lane.b32.xlu0 %v338, 4
  %v370 = vpop.permute.xlu0 %369
  %371 = vrot.lane.b32.xlu0 %v340, 4
  %v372 = vpop.permute.xlu0 %371
  %373 = vrot.lane.b32.xlu0 %v342, 4
  %v374 = vpop.permute.xlu0 %373
  %375 = vrot.lane.b32.xlu0 %v344, 4
  %v376 = vpop.permute.xlu0 %375
  %377 = vrot.lane.b32.xlu0 %v346, 4
  %v378 = vpop.permute.xlu0 %377
  %379 = vrot.lane.b32.xlu0 %v348, 4
  %v380 = vpop.permute.xlu0 %379
  %381 = vrot.lane.b32.xlu0 %v350, 4
  %v382 = vpop.permute.xlu0 %381
  %383 = vrot.lane.b32.xlu0 %v352, 4
  %v384 = vpop.permute.xlu0 %383
  %vm401 = vcmask 1045504
  %v402 = vrot.slane %v295, 2
  %v403 = vsel %vm401, %v402, %v402
  %v404 = vrot.slane %v288, 2
  %v405 = vsel %vm401, %v404, %v404
  %v406 = vrot.slane %v289, 2
  %v407 = vsel %vm401, %v406, %v406
  %v408 = vrot.slane %v290, 2
  %v409 = vsel %vm401, %v408, %v408
  %v410 = vrot.slane %v291, 2
  %v411 = vsel %vm401, %v410, %v410
  %v412 = vrot.slane %v292, 2
  %v413 = vsel %vm401, %v412, %v412
  %v414 = vrot.slane %v293, 2
  %v415 = vsel %vm401, %v414, %v414
  %v416 = vrot.slane %v294, 2
  %v417 = vsel %vm401, %v416, %v416
  %v418 = vrot.slane %v303, 2
  %v419 = vsel %vm401, %v418, %v418
  %v420 = vrot.slane %v296, 2
  %v421 = vsel %vm401, %v420, %v420
  %v422 = vrot.slane %v297, 2
  %v423 = vsel %vm401, %v422, %v422
  %v424 = vrot.slane %v298, 2
  %v425 = vsel %vm401, %v424, %v424
  %v426 = vrot.slane %v299, 2
  %v427 = vsel %vm401, %v426, %v426
  %v428 = vrot.slane %v300, 2
  %v429 = vsel %vm401, %v428, %v428
  %v430 = vrot.slane %v301, 2
  %v431 = vsel %vm401, %v430, %v430
  %v432 = vrot.slane %v302, 2
  %v433 = vsel %vm401, %v432, %v432
  %434 = vrot.lane.b32.xlu0 %v403, 8
  %v435 = vpop.permute.xlu0 %434
  %436 = vrot.lane.b32.xlu0 %v405, 8
  %v437 = vpop.permute.xlu0 %436
  %438 = vrot.lane.b32.xlu0 %v407, 8
  %v439 = vpop.permute.xlu0 %438
  %440 = vrot.lane.b32.xlu0 %v409, 8
  %v441 = vpop.permute.xlu0 %440
  %442 = vrot.lane.b32.xlu0 %v411, 8
  %v443 = vpop.permute.xlu0 %442
  %444 = vrot.lane.b32.xlu0 %v413, 8
  %v445 = vpop.permute.xlu0 %444
  %446 = vrot.lane.b32.xlu0 %v415, 8
  %v447 = vpop.permute.xlu0 %446
  %448 = vrot.lane.b32.xlu0 %v417, 8
  %v449 = vpop.permute.xlu0 %448
  %450 = vrot.lane.b32.xlu0 %v419, 8
  %v451 = vpop.permute.xlu0 %450
  %452 = vrot.lane.b32.xlu0 %v421, 8
  %v453 = vpop.permute.xlu0 %452
  %454 = vrot.lane.b32.xlu0 %v423, 8
  %v455 = vpop.permute.xlu0 %454
  %456 = vrot.lane.b32.xlu0 %v425, 8
  %v457 = vpop.permute.xlu0 %456
  %458 = vrot.lane.b32.xlu0 %v427, 8
  %v459 = vpop.permute.xlu0 %458
  %460 = vrot.lane.b32.xlu0 %v429, 8
  %v461 = vpop.permute.xlu0 %460
  %462 = vrot.lane.b32.xlu0 %v431, 8
  %v463 = vpop.permute.xlu0 %462
  %464 = vrot.lane.b32.xlu0 %v433, 8
  %v465 = vpop.permute.xlu0 %464
  %vm482 = vcmask 31744
  %v483 = vsel %vm482, %v295, %v354
  %v484 = vsel %vm482, %v288, %v356
  %v485 = vsel %vm482, %v289, %v358
  %v486 = vsel %vm482, %v290, %v360
  %v487 = vsel %vm482, %v291, %v362
  %v488 = vsel %vm482, %v292, %v364
  %v489 = vsel %vm482, %v293, %v366
  %v490 = vsel %vm482, %v294, %v368
  %v491 = vsel %vm482, %v303, %v370
  %v492 = vsel %vm482, %v296, %v372
  %v493 = vsel %vm482, %v297, %v374
  %v494 = vsel %vm482, %v298, %v376
  %v495 = vsel %vm482, %v299, %v378
  %v496 = vsel %vm482, %v300, %v380
  %v497 = vsel %vm482, %v301, %v382
  %v498 = vsel %vm482, %v302, %v384
  %vm499 = vcmask 64512
  %v500 = vsel %vm499, %v483, %v435
  %v501 = vsel %vm499, %v484, %v437
  %v502 = vsel %vm499, %v485, %v439
  %v503 = vsel %vm499, %v486, %v441
  %v504 = vsel %vm499, %v487, %v443
  %v505 = vsel %vm499, %v488, %v445
  %v506 = vsel %vm499, %v489, %v447
  %v507 = vsel %vm499, %v490, %v449
  %v508 = vsel %vm499, %v491, %v451
  %v509 = vsel %vm499, %v492, %v453
  %v510 = vsel %vm499, %v493, %v455
  %v511 = vsel %vm499, %v494, %v457
  %v512 = vsel %vm499, %v495, %v459
  %v513 = vsel %vm499, %v496, %v461
  %v514 = vsel %vm499, %v497, %v463
  %v515 = vsel %vm499, %v498, %v465
  %532 = vrot.lane.b32.xlu0 %v501, 12
  %v533 = vpop.permute.xlu0 %532
  %534 = vrot.lane.b32.xlu0 %v502, 12
  %v535 = vpop.permute.xlu0 %534
  %536 = vrot.lane.b32.xlu0 %v503, 12
  %v537 = vpop.permute.xlu0 %536
  %538 = vrot.lane.b32.xlu0 %v504, 12
  %v539 = vpop.permute.xlu0 %538
  %540 = vrot.lane.b32.xlu0 %v505, 12
  %v541 = vpop.permute.xlu0 %540
  %542 = vrot.lane.b32.xlu0 %v506, 12
  %v543 = vpop.permute.xlu0 %542
  %544 = vrot.lane.b32.xlu0 %v507, 12
  %v545 = vpop.permute.xlu0 %544
  %546 = vrot.lane.b32.xlu0 %v500, 12
  %v547 = vpop.permute.xlu0 %546
  %548 = vrot.lane.b32.xlu0 %v509, 12
  %v549 = vpop.permute.xlu0 %548
  %550 = vrot.lane.b32.xlu0 %v510, 12
  %v551 = vpop.permute.xlu0 %550
  %552 = vrot.lane.b32.xlu0 %v511, 12
  %v553 = vpop.permute.xlu0 %552
  %554 = vrot.lane.b32.xlu0 %v512, 12
  %v555 = vpop.permute.xlu0 %554
  %556 = vrot.lane.b32.xlu0 %v513, 12
  %v557 = vpop.permute.xlu0 %556
  %558 = vrot.lane.b32.xlu0 %v514, 12
  %v559 = vpop.permute.xlu0 %558
  %560 = vrot.lane.b32.xlu0 %v515, 12
  %v561 = vpop.permute.xlu0 %560
  %562 = vrot.lane.b32.xlu0 %v508, 12
  %v563 = vpop.permute.xlu0 %562
  %580 = vrot.lane.b32.xlu0 %v502, 24
  %v581 = vpop.permute.xlu0 %580
  %582 = vrot.lane.b32.xlu0 %v503, 24
  %v583 = vpop.permute.xlu0 %582
  %584 = vrot.lane.b32.xlu0 %v504, 24
  %v585 = vpop.permute.xlu0 %584
  %586 = vrot.lane.b32.xlu0 %v505, 24
  %v587 = vpop.permute.xlu0 %586
  %588 = vrot.lane.b32.xlu0 %v506, 24
  %v589 = vpop.permute.xlu0 %588
  %590 = vrot.lane.b32.xlu0 %v507, 24
  %v591 = vpop.permute.xlu0 %590
  %592 = vrot.lane.b32.xlu0 %v500, 24
  %v593 = vpop.permute.xlu0 %592
  %594 = vrot.lane.b32.xlu0 %v501, 24
  %v595 = vpop.permute.xlu0 %594
  %596 = vrot.lane.b32.xlu0 %v510, 24
  %v597 = vpop.permute.xlu0 %596
  %598 = vrot.lane.b32.xlu0 %v511, 24
  %v599 = vpop.permute.xlu0 %598
  %600 = vrot.lane.b32.xlu0 %v512, 24
  %v601 = vpop.permute.xlu0 %600
  %602 = vrot.lane.b32.xlu0 %v513, 24
  %v603 = vpop.permute.xlu0 %602
  %604 = vrot.lane.b32.xlu0 %v514, 24
  %v605 = vpop.permute.xlu0 %604
  %606 = vrot.lane.b32.xlu0 %v515, 24
  %v607 = vpop.permute.xlu0 %606
  %608 = vrot.lane.b32.xlu0 %v508, 24
  %v609 = vpop.permute.xlu0 %608
  %610 = vrot.lane.b32.xlu0 %v509, 24
  %v611 = vpop.permute.xlu0 %610
  %vm628 = vcmask 97280
  %v629 = vsel %vm628, %v500, %v533
  %v630 = vsel %vm628, %v501, %v535
  %v631 = vsel %vm628, %v502, %v537
  %v632 = vsel %vm628, %v503, %v539
  %v633 = vsel %vm628, %v504, %v541
  %v634 = vsel %vm628, %v505, %v543
  %v635 = vsel %vm628, %v506, %v545
  %v636 = vsel %vm628, %v507, %v547
  %v637 = vsel %vm628, %v508, %v549
  %v638 = vsel %vm628, %v509, %v551
  %v639 = vsel %vm628, %v510, %v553
  %v640 = vsel %vm628, %v511, %v555
  %v641 = vsel %vm628, %v512, %v557
  %v642 = vsel %vm628, %v513, %v559
  %v643 = vsel %vm628, %v514, %v561
  %v644 = vsel %vm628, %v515, %v563
  %vm645 = vcmask 195584
  %v646 = vsel %vm645, %v629, %v581
  %v647 = vsel %vm645, %v630, %v583
  %v648 = vsel %vm645, %v631, %v585
  %v649 = vsel %vm645, %v632, %v587
  %v650 = vsel %vm645, %v633, %v589
  %v651 = vsel %vm645, %v634, %v591
  %v652 = vsel %vm645, %v635, %v593
  %v653 = vsel %vm645, %v636, %v595
  %v654 = vsel %vm645, %v637, %v597
  %v655 = vsel %vm645, %v638, %v599
  %v656 = vsel %vm645, %v639, %v601
  %v657 = vsel %vm645, %v640, %v603
  %v658 = vsel %vm645, %v641, %v605
  %v659 = vsel %vm645, %v642, %v607
  %v660 = vsel %vm645, %v643, %v609
  %v661 = vsel %vm645, %v644, %v611
  %vm662 = vcmask 293888
  %v664 = vsel %vm662, %v646, 0
  %v667 = vsel %vm662, %v647, 0
  %v670 = vsel %vm662, %v648, 0
  %v673 = vsel %vm662, %v649, 0
  %v676 = vsel %vm662, %v650, 0
  %v679 = vsel %vm662, %v651, 0
  %v682 = vsel %vm662, %v652, 0
  %v685 = vsel %vm662, %v653, 0
  %v688 = vsel %vm662, %v654, 0
  %v691 = vsel %vm662, %v655, 0
  %v694 = vsel %vm662, %v656, 0
  %v697 = vsel %vm662, %v657, 0
  %v700 = vsel %vm662, %v658, 0
  %v703 = vsel %vm662, %v659, 0
  %v706 = vsel %vm662, %v660, 0
  %v709 = vsel %vm662, %v661, 0
  %vm711 = vcmask 1043456
  %v713 = vsel %vm711, %v238, 0
  %715 = vmatprep.subr.mxu0 0.0
  %716 = vmatpush1.msra.mxu0 %v234
  %717 = vmatprep.subr.mxu0 0.0
  %718 = vmatpush1.msra.mxu0 %v235
  %719 = vmatprep.subr.mxu0 0.0
  %720 = vmatpush1.msra.mxu0 %v236
  %721 = vmatprep.subr.mxu0 0.0
  %722 = vmatpush1.msra.mxu0 %v237
  %723 = vmatprep.subr.mxu0 0.0
  %724 = vmatpush1.msra.mxu0 %v713
  %725 = vmatprep.subr.mxu0 0.0
  %726 = vmatpush1.msra.mxu0 0.0
  %727 = vmatprep.subr.mxu0 0.0
  %728 = vmatpush1.msra.mxu0 0.0
  %729 = vmatprep.subr.mxu0 0.0
  %730 = vmatpush1.msra.mxu0 0.0
  %731 = vmatprep.subr.mxu0 0.0
  %732 = vmatpush1.msra.mxu0 0.0
  %733 = vmatprep.subr.mxu0 0.0
  %734 = vmatpush1.msra.mxu0 0.0
  %735 = vmatprep.subr.mxu0 0.0
  %736 = vmatpush1.msra.mxu0 0.0
  %737 = vmatprep.subr.mxu0 0.0
  %738 = vmatpush1.msra.mxu0 0.0
  %739 = vmatprep.subr.mxu0 0.0
  %740 = vmatpush1.msra.mxu0 0.0
  %741 = vmatprep.subr.mxu0 0.0
  %742 = vmatpush1.msra.mxu0 0.0
  %743 = vmatprep.subr.mxu0 0.0
  %744 = vmatpush1.msra.mxu0 0.0
  %745 = vmatprep.subr.mxu0 0.0
  %746 = vmatpush1.msra.mxu0 0.0
  %747 = vmatprep.subr.mxu0 0.0
  %748 = vmatpush1.msra.mxu0 0.0
  %749 = vmatprep.subr.mxu0 0.0
  %750 = vmatpush1.msra.mxu0 0.0
  %751 = vmatprep.subr.mxu0 0.0
  %752 = vmatpush1.msra.mxu0 0.0
  %753 = vmatprep.subr.mxu0 0.0
  %754 = vmatpush1.msra.mxu0 0.0
  %755 = vmatprep.subr.mxu0 0.0
  %756 = vmatpush1.msra.mxu0 0.0
  %757 = vmatprep.subr.mxu0 0.0
  %758 = vmatpush1.msra.mxu0 0.0
  %759 = vmatprep.subr.mxu0 0.0
  %760 = vmatpush1.msra.mxu0 0.0
  %761 = vmatprep.subr.mxu0 0.0
  %762 = vmatpush1.msra.mxu0 0.0
  %763 = vmatprep.subr.mxu0 0.0
  %764 = vmatpush1.msra.mxu0 0.0
  %765 = vmatprep.subr.mxu0 0.0
  %766 = vmatpush1.msra.mxu0 0.0
  %767 = vmatprep.subr.mxu0 0.0
  %768 = vmatpush1.msra.mxu0 0.0
  %769 = vmatprep.subr.mxu0 0.0
  %770 = vmatpush1.msra.mxu0 0.0
  %771 = vmatprep.subr.mxu0 0.0
  %772 = vmatpush1.msra.mxu0 0.0
  %773 = vmatprep.subr.mxu0 0.0
  %774 = vmatpush1.msra.mxu0 0.0
  %775 = vmatprep.subr.mxu0 0.0
  %776 = vmatpush1.msra.mxu0 0.0
  %777 = vmatprep.subr.mxu0 0.0
  %778 = vmatpush1.msra.mxu0 0.0
  %779 = vmatprep.mubr.f32.mxu0 0.0
  %780 = vmatmul.mubr.f32.gmra.mrb[0].mxu0 %v664
  %v781 = vpop.f32.mrb[0].mxu0
  %v782 = vadd.f32 0.0, %v781
  %v783 = vpop.f32.mrb[0].mxu0
  %784 = vmatprep.mubr.f32.mxu0 0.0
  %785 = vmatmul.mubr.f32.gmra.mrb[0].mxu0 %v667
  %v786 = vpop.f32.mrb[0].mxu0
  %v787 = vadd.f32 0.0, %v786
  %v788 = vpop.f32.mrb[0].mxu0
  %789 = vmatprep.mubr.f32.mxu0 0.0
  %790 = vmatmul.mubr.f32.gmra.mrb[0].mxu0 %v670
  %v791 = vpop.f32.mrb[0].mxu0
  %v792 = vadd.f32 0.0, %v791
  %v793 = vpop.f32.mrb[0].mxu0
  %794 = vmatprep.mubr.f32.mxu0 0.0
  %795 = vmatmul.mubr.f32.gmra.mrb[0].mxu0 %v673
  %v796 = vpop.f32.mrb[0].mxu0
  %v797 = vadd.f32 0.0, %v796
  %v798 = vpop.f32.mrb[0].mxu0
  %799 = vmatprep.mubr.f32.mxu0 0.0
  %800 = vmatmul.mubr.f32.gmra.mrb[0].mxu0 %v676
  %v801 = vpop.f32.mrb[0].mxu0
  %v802 = vadd.f32 0.0, %v801
  %v803 = vpop.f32.mrb[0].mxu0
  %804 = vmatprep.mubr.f32.mxu0 0.0
  %805 = vmatmul.mubr.f32.gmra.mrb[0].mxu0 %v679
  %v806 = vpop.f32.mrb[0].mxu0
  %v807 = vadd.f32 0.0, %v806
  %v808 = vpop.f32.mrb[0].mxu0
  %809 = vmatprep.mubr.f32.mxu0 0.0
  %810 = vmatmul.mubr.f32.gmra.mrb[0].mxu0 %v682
  %v811 = vpop.f32.mrb[0].mxu0
  %v812 = vadd.f32 0.0, %v811
  %v813 = vpop.f32.mrb[0].mxu0
  %814 = vmatprep.mubr.f32.mxu0 0.0
  %815 = vmatmul.mubr.f32.gmra.mrb[0].mxu0 %v685
  %v816 = vpop.f32.mrb[0].mxu0
  %v817 = vadd.f32 0.0, %v816
  %v818 = vpop.f32.mrb[0].mxu0
  %819 = vmatprep.mubr.f32.mxu0 0.0
  %820 = vmatmul.mubr.f32.gmra.mrb[0].mxu0 %v688
  %v821 = vpop.f32.mrb[0].mxu0
  %v822 = vadd.f32 0.0, %v821
  %v823 = vpop.f32.mrb[0].mxu0
  %824 = vmatprep.mubr.f32.mxu0 0.0
  %825 = vmatmul.mubr.f32.gmra.mrb[0].mxu0 %v691
  %v826 = vpop.f32.mrb[0].mxu0
  %v827 = vadd.f32 0.0, %v826
  %v828 = vpop.f32.mrb[0].mxu0
  %829 = vmatprep.mubr.f32.mxu0 0.0
  %830 = vmatmul.mubr.f32.gmra.mrb[0].mxu0 %v694
  %v831 = vpop.f32.mrb[0].mxu0
  %v832 = vadd.f32 0.0, %v831
  %v833 = vpop.f32.mrb[0].mxu0
  %834 = vmatprep.mubr.f32.mxu0 0.0
  %835 = vmatmul.mubr.f32.gmra.mrb[0].mxu0 %v697
  %v836 = vpop.f32.mrb[0].mxu0
  %v837 = vadd.f32 0.0, %v836
  %v838 = vpop.f32.mrb[0].mxu0
  %839 = vmatprep.mubr.f32.mxu0 0.0
  %840 = vmatmul.mubr.f32.gmra.mrb[0].mxu0 %v700
  %v841 = vpop.f32.mrb[0].mxu0
  %v842 = vadd.f32 0.0, %v841
  %v843 = vpop.f32.mrb[0].mxu0
  %844 = vmatprep.mubr.f32.mxu0 0.0
  %845 = vmatmul.mubr.f32.gmra.mrb[0].mxu0 %v703
  %v846 = vpop.f32.mrb[0].mxu0
  %v847 = vadd.f32 0.0, %v846
  %v848 = vpop.f32.mrb[0].mxu0
  %849 = vmatprep.mubr.f32.mxu0 0.0
  %850 = vmatmul.mubr.f32.gmra.mrb[0].mxu0 %v706
  %v851 = vpop.f32.mrb[0].mxu0
  %v852 = vadd.f32 0.0, %v851
  %v853 = vpop.f32.mrb[0].mxu0
  %854 = vmatprep.mubr.f32.mxu0 0.0
  %855 = vmatmul.mubr.f32.gmra.mrb[0].mxu0 %v709
  %v856 = vpop.f32.mrb[0].mxu0
  %v857 = vadd.f32 0.0, %v856
  %v858 = vpop.f32.mrb[0].mxu0
  %859 = vdwg.mxu0
  %v860 = vsel %vm499, %v782, 0.0
  %v861 = vsel %vm499, %v787, 0.0
  %v862 = vadd.f32 %v860, %v861
  %v863 = vsel %vm499, %v792, 0.0
  %v864 = vadd.f32 %v862, %v863
  %v865 = vsel %vm499, %v797, 0.0
  %v866 = vadd.f32 %v864, %v865
  %v867 = vsel %vm499, %v802, 0.0
  %v868 = vadd.f32 %v866, %v867
  %v869 = vsel %vm499, %v807, 0.0
  %v870 = vadd.f32 %v868, %v869
  %v871 = vsel %vm499, %v812, 0.0
  %v872 = vadd.f32 %v870, %v871
  %v873 = vsel %vm499, %v817, 0.0
  %v874 = vadd.f32 %v872, %v873
  %v875 = vsel %vm499, %v822, 0.0
  %v876 = vadd.f32 %v874, %v875
  %v877 = vsel %vm499, %v827, 0.0
  %v878 = vadd.f32 %v876, %v877
  %v879 = vsel %vm499, %v832, 0.0
  %v880 = vadd.f32 %v878, %v879
  %v881 = vsel %vm499, %v837, 0.0
  %v882 = vadd.f32 %v880, %v881
  %v883 = vsel %vm499, %v842, 0.0
  %v884 = vadd.f32 %v882, %v883
  %v885 = vsel %vm499, %v847, 0.0
  %v886 = vadd.f32 %v884, %v885
  %v887 = vsel %vm499, %v852, 0.0
  %v888 = vadd.f32 %v886, %v887
  %v889 = vsel %vm499, %v857, 0.0
  %v890 = vadd.f32 %v888, %v889
  %v891 = vrot.slane %v890, 4
  %v892 = vadd.f32 %v890, %v891
  %v893 = vrot.slane %v892, 2
  %v894 = vadd.f32 %v892, %v893
  %v895 = vrot.slane %v894, 1
  %v896 = vadd.f32 %v894, %v895
  %v897 = vmul.f32 %v896, 0.0078125
  %v898 = vmul.f32 %v782, %v782
  %v899 = vmul.f32 %v787, %v787
  %v900 = vmul.f32 %v792, %v792
  %v901 = vmul.f32 %v797, %v797
  %v902 = vmul.f32 %v802, %v802
  %v903 = vmul.f32 %v807, %v807
  %v904 = vmul.f32 %v812, %v812
  %v905 = vmul.f32 %v817, %v817
  %v906 = vmul.f32 %v822, %v822
  %v907 = vmul.f32 %v827, %v827
  %v908 = vmul.f32 %v832, %v832
  %v909 = vmul.f32 %v837, %v837
  %v910 = vmul.f32 %v842, %v842
  %v911 = vmul.f32 %v847, %v847
  %v912 = vmul.f32 %v852, %v852
  %v913 = vmul.f32 %v857, %v857
  %v914 = vsel %vm499, %v898, 0.0
  %v915 = vsel %vm499, %v899, 0.0
  %v916 = vadd.f32 %v914, %v915
  %v917 = vsel %vm499, %v900, 0.0
  %v918 = vadd.f32 %v916, %v917
  %v919 = vsel %vm499, %v901, 0.0
  %v920 = vadd.f32 %v918, %v919
  %v921 = vsel %vm499, %v902, 0.0
  %v922 = vadd.f32 %v920, %v921
  %v923 = vsel %vm499, %v903, 0.0
  %v924 = vadd.f32 %v922, %v923
  %v925 = vsel %vm499, %v904, 0.0
  %v926 = vadd.f32 %v924, %v925
  %v927 = vsel %vm499, %v905, 0.0
  %v928 = vadd.f32 %v926, %v927
  %v929 = vsel %vm499, %v906, 0.0
  %v930 = vadd.f32 %v928, %v929
  %v931 = vsel %vm499, %v907, 0.0
  %v932 = vadd.f32 %v930, %v931
  %v933 = vsel %vm499, %v908, 0.0
  %v934 = vadd.f32 %v932, %v933
  %v935 = vsel %vm499, %v909, 0.0
  %v936 = vadd.f32 %v934, %v935
  %v937 = vsel %vm499, %v910, 0.0
  %v938 = vadd.f32 %v936, %v937
  %v939 = vsel %vm499, %v911, 0.0
  %v940 = vadd.f32 %v938, %v939
  %v941 = vsel %vm499, %v912, 0.0
  %v942 = vadd.f32 %v940, %v941
  %v943 = vsel %vm499, %v913, 0.0
  %v944 = vadd.f32 %v942, %v943
  %v945 = vrot.slane %v944, 4
  %v946 = vadd.f32 %v944, %v945
  %v947 = vrot.slane %v946, 2
  %v948 = vadd.f32 %v946, %v947
  %v949 = vrot.slane %v948, 1
  %v950 = vadd.f32 %v948, %v949
  %v951 = vmul.f32 %v950, 0.0078125
  %v952 = vmul.f32 %v897, %v897
  %v953 = vsub.f32 %v951, %v952
  %v954 = vadd.f32 %v953, 1e-05
  %v955 = vrsqrt.pop %v954
  %v956 = vsub.f32 %v782, %v897
  %v957 = vsub.f32 %v787, %v897
  %v958 = vsub.f32 %v792, %v897
  %v959 = vsub.f32 %v797, %v897
  %v960 = vsub.f32 %v802, %v897
  %v961 = vsub.f32 %v807, %v897
  %v962 = vsub.f32 %v812, %v897
  %v963 = vsub.f32 %v817, %v897
  %v964 = vsub.f32 %v822, %v897
  %v965 = vsub.f32 %v827, %v897
  %v966 = vsub.f32 %v832, %v897
  %v967 = vsub.f32 %v837, %v897
  %v968 = vsub.f32 %v842, %v897
  %v969 = vsub.f32 %v847, %v897
  %v970 = vsub.f32 %v852, %v897
  %v971 = vsub.f32 %v857, %v897
  %v972 = vld [vmem:[%s2] sm:$0x1]
  %v973 = vmul.f32 %v955, %v972
  %v974 = vlaneseq
  %v975 = vshrl.u32 %v974, 7
  %v976 = vsub.s32 0, %v975
  %v977 = vrot.slane %v973, %v976
  %v978 = vmul.f32 %v956, %v977
  %v979 = vmul.f32 %v957, %v977
  %v980 = vmul.f32 %v958, %v977
  %v981 = vmul.f32 %v959, %v977
  %v982 = vmul.f32 %v960, %v977
  %v983 = vmul.f32 %v961, %v977
  %v984 = vmul.f32 %v962, %v977
  %v985 = vmul.f32 %v963, %v977
  %v986 = vmul.f32 %v964, %v977
  %v987 = vmul.f32 %v965, %v977
  %v988 = vmul.f32 %v966, %v977
  %v989 = vmul.f32 %v967, %v977
  %v990 = vmul.f32 %v968, %v977
  %v991 = vmul.f32 %v969, %v977
  %v992 = vmul.f32 %v970, %v977
  %v993 = vmul.f32 %v971, %v977
  %v994 = vld [vmem:[%s3] sm:$0x1]
  %v996 = vlaneseq
  %v997 = vshrl.u32 %v996, 7
  %v998 = vsub.s32 0, %v997
  %v999 = vrot.slane %v994, %v998
  %v1001 = vadd.f32 %v978, %v999
  %v1002 = vadd.f32 %v979, %v999
  %v1003 = vadd.f32 %v980, %v999
  %v1004 = vadd.f32 %v981, %v999
  %v1005 = vadd.f32 %v982, %v999
  %v1006 = vadd.f32 %v983, %v999
  %v1007 = vadd.f32 %v984, %v999
  %v1008 = vadd.f32 %v985, %v999
  %v1009 = vadd.f32 %v986, %v999
  %v1010 = vadd.f32 %v987, %v999
  %v1011 = vadd.f32 %v988, %v999
  %v1012 = vadd.f32 %v989, %v999
  %v1013 = vadd.f32 %v990, %v999
  %v1014 = vadd.f32 %v991, %v999
  %v1015 = vadd.f32 %v992, %v999
  %v1016 = vadd.f32 %v993, %v999
  %v1017 = vmax.f32 %v1001, 0.0
  %v1018 = vmax.f32 %v1002, 0.0
  %v1019 = vmax.f32 %v1003, 0.0
  %v1020 = vmax.f32 %v1004, 0.0
  %v1021 = vmax.f32 %v1005, 0.0
  %v1022 = vmax.f32 %v1006, 0.0
  %v1023 = vmax.f32 %v1007, 0.0
  %v1024 = vmax.f32 %v1008, 0.0
  %v1025 = vmax.f32 %v1009, 0.0
  %v1026 = vmax.f32 %v1010, 0.0
  %v1027 = vmax.f32 %v1011, 0.0
  %v1028 = vmax.f32 %v1012, 0.0
  %v1029 = vmax.f32 %v1013, 0.0
  %v1030 = vmax.f32 %v1014, 0.0
  %v1031 = vmax.f32 %v1015, 0.0
  %v1032 = vmax.f32 %v1016, 0.0
  %v1033 = vld [vmem:[%s4] sm:$0xff]
  %v1034 = vld [vmem:[%s4 + $0x8] sm:$0xff]
  %v1035 = vld [vmem:[%s4 + $0x10] sm:$0xff]
  %v1036 = vld [vmem:[%s4 + $0x18] sm:$0xff]
  %v1037 = vld [vmem:[%s4 + $0x20] sm:$0xff]
  %v1038 = vld [vmem:[%s4 + $0x28] sm:$0xff]
  %v1039 = vld [vmem:[%s4 + $0x30] sm:$0xff]
  %v1040 = vld [vmem:[%s4 + $0x38] sm:$0xff]
  %v1041 = vld [vmem:[%s4 + $0x40] sm:$0xff]
  %v1058 = vrot.slane %v1017, 7
  %v1059 = vrot.slane %v1018, 7
  %v1060 = vrot.slane %v1019, 7
  %v1061 = vrot.slane %v1020, 7
  %v1062 = vrot.slane %v1021, 7
  %v1063 = vrot.slane %v1022, 7
  %v1064 = vrot.slane %v1023, 7
  %v1065 = vrot.slane %v1024, 7
  %v1066 = vrot.slane %v1025, 7
  %v1067 = vrot.slane %v1026, 7
  %v1068 = vrot.slane %v1027, 7
  %v1069 = vrot.slane %v1028, 7
  %v1070 = vrot.slane %v1029, 7
  %v1071 = vrot.slane %v1030, 7
  %v1072 = vrot.slane %v1031, 7
  %v1073 = vrot.slane %v1032, 7
  %v1090 = vsel %vm287, %v1058, %v1058
  %v1091 = vsel %vm287, %v1059, %v1059
  %v1092 = vsel %vm287, %v1060, %v1060
  %v1093 = vsel %vm287, %v1061, %v1061
  %v1094 = vsel %vm287, %v1062, %v1062
  %v1095 = vsel %vm287, %v1063, %v1063
  %v1096 = vsel %vm287, %v1064, %v1064
  %v1097 = vsel %vm287, %v1065, %v1065
  %v1098 = vsel %vm287, %v1066, %v1066
  %v1099 = vsel %vm287, %v1067, %v1067
  %v1100 = vsel %vm287, %v1068, %v1068
  %v1101 = vsel %vm287, %v1069, %v1069
  %v1102 = vsel %vm287, %v1070, %v1070
  %v1103 = vsel %vm287, %v1071, %v1071
  %v1104 = vsel %vm287, %v1072, %v1072
  %v1105 = vsel %vm287, %v1073, %v1073
  %v1122 = vrot.slane %v1097, 1
  %v1123 = vsel %vm320, %v1122, %v1122
  %v1124 = vrot.slane %v1090, 1
  %v1125 = vsel %vm320, %v1124, %v1124
  %v1126 = vrot.slane %v1091, 1
  %v1127 = vsel %vm320, %v1126, %v1126
  %v1128 = vrot.slane %v1092, 1
  %v1129 = vsel %vm320, %v1128, %v1128
  %v1130 = vrot.slane %v1093, 1
  %v1131 = vsel %vm320, %v1130, %v1130
  %v1132 = vrot.slane %v1094, 1
  %v1133 = vsel %vm320, %v1132, %v1132
  %v1134 = vrot.slane %v1095, 1
  %v1135 = vsel %vm320, %v1134, %v1134
  %v1136 = vrot.slane %v1096, 1
  %v1137 = vsel %vm320, %v1136, %v1136
  %v1138 = vrot.slane %v1105, 1
  %v1139 = vsel %vm320, %v1138, %v1138
  %v1140 = vrot.slane %v1098, 1
  %v1141 = vsel %vm320, %v1140, %v1140
  %v1142 = vrot.slane %v1099, 1
  %v1143 = vsel %vm320, %v1142, %v1142
  %v1144 = vrot.slane %v1100, 1
  %v1145 = vsel %vm320, %v1144, %v1144
  %v1146 = vrot.slane %v1101, 1
  %v1147 = vsel %vm320, %v1146, %v1146
  %v1148 = vrot.slane %v1102, 1
  %v1149 = vsel %vm320, %v1148, %v1148
  %v1150 = vrot.slane %v1103, 1
  %v1151 = vsel %vm320, %v1150, %v1150
  %v1152 = vrot.slane %v1104, 1
  %v1153 = vsel %vm320, %v1152, %v1152
  %1154 = vrot.lane.b32.xlu0 %v1123, 8
  %v1155 = vpop.permute.xlu0 %1154
  %1156 = vrot.lane.b32.xlu0 %v1125, 8
  %v1157 = vpop.permute.xlu0 %1156
  %1158 = vrot.lane.b32.xlu0 %v1127, 8
  %v1159 = vpop.permute.xlu0 %1158
  %1160 = vrot.lane.b32.xlu0 %v1129, 8
  %v1161 = vpop.permute.xlu0 %1160
  %1162 = vrot.lane.b32.xlu0 %v1131, 8
  %v1163 = vpop.permute.xlu0 %1162
  %1164 = vrot.lane.b32.xlu0 %v1133, 8
  %v1165 = vpop.permute.xlu0 %1164
  %1166 = vrot.lane.b32.xlu0 %v1135, 8
  %v1167 = vpop.permute.xlu0 %1166
  %1168 = vrot.lane.b32.xlu0 %v1137, 8
  %v1169 = vpop.permute.xlu0 %1168
  %1170 = vrot.lane.b32.xlu0 %v1139, 8
  %v1171 = vpop.permute.xlu0 %1170
  %1172 = vrot.lane.b32.xlu0 %v1141, 8
  %v1173 = vpop.permute.xlu0 %1172
  %1174 = vrot.lane.b32.xlu0 %v1143, 8
  %v1175 = vpop.permute.xlu0 %1174
  %1176 = vrot.lane.b32.xlu0 %v1145, 8
  %v1177 = vpop.permute.xlu0 %1176
  %1178 = vrot.lane.b32.xlu0 %v1147, 8
  %v1179 = vpop.permute.xlu0 %1178
  %1180 = vrot.lane.b32.xlu0 %v1149, 8
  %v1181 = vpop.permute.xlu0 %1180
  %1182 = vrot.lane.b32.xlu0 %v1151, 8
  %v1183 = vpop.permute.xlu0 %1182
  %1184 = vrot.lane.b32.xlu0 %v1153, 8
  %v1185 = vpop.permute.xlu0 %1184
  %v1202 = vrot.slane %v1097, 2
  %v1203 = vsel %vm401, %v1202, %v1202
  %v1204 = vrot.slane %v1090, 2
  %v1205 = vsel %vm401, %v1204, %v1204
  %v1206 = vrot.slane %v1091, 2
  %v1207 = vsel %vm401, %v1206, %v1206
  %v1208 = vrot.slane %v1092, 2
  %v1209 = vsel %vm401, %v1208, %v1208
  %v1210 = vrot.slane %v1093, 2
  %v1211 = vsel %vm401, %v1210, %v1210
  %v1212 = vrot.slane %v1094, 2
  %v1213 = vsel %vm401, %v1212, %v1212
  %v1214 = vrot.slane %v1095, 2
  %v1215 = vsel %vm401, %v1214, %v1214
  %v1216 = vrot.slane %v1096, 2
  %v1217 = vsel %vm401, %v1216, %v1216
  %v1218 = vrot.slane %v1105, 2
  %v1219 = vsel %vm401, %v1218, %v1218
  %v1220 = vrot.slane %v1098, 2
  %v1221 = vsel %vm401, %v1220, %v1220
  %v1222 = vrot.slane %v1099, 2
  %v1223 = vsel %vm401, %v1222, %v1222
  %v1224 = vrot.slane %v1100, 2
  %v1225 = vsel %vm401, %v1224, %v1224
  %v1226 = vrot.slane %v1101, 2
  %v1227 = vsel %vm401, %v1226, %v1226
  %v1228 = vrot.slane %v1102, 2
  %v1229 = vsel %vm401, %v1228, %v1228
  %v1230 = vrot.slane %v1103, 2
  %v1231 = vsel %vm401, %v1230, %v1230
  %v1232 = vrot.slane %v1104, 2
  %v1233 = vsel %vm401, %v1232, %v1232
  %1234 = vrot.lane.b32.xlu0 %v1203, 16
  %v1235 = vpop.permute.xlu0 %1234
  %1236 = vrot.lane.b32.xlu0 %v1205, 16
  %v1237 = vpop.permute.xlu0 %1236
  %1238 = vrot.lane.b32.xlu0 %v1207, 16
  %v1239 = vpop.permute.xlu0 %1238
  %1240 = vrot.lane.b32.xlu0 %v1209, 16
  %v1241 = vpop.permute.xlu0 %1240
  %1242 = vrot.lane.b32.xlu0 %v1211, 16
  %v1243 = vpop.permute.xlu0 %1242
  %1244 = vrot.lane.b32.xlu0 %v1213, 16
  %v1245 = vpop.permute.xlu0 %1244
  %1246 = vrot.lane.b32.xlu0 %v1215, 16
  %v1247 = vpop.permute.xlu0 %1246
  %1248 = vrot.lane.b32.xlu0 %v1217, 16
  %v1249 = vpop.permute.xlu0 %1248
  %1250 = vrot.lane.b32.xlu0 %v1219, 16
  %v1251 = vpop.permute.xlu0 %1250
  %1252 = vrot.lane.b32.xlu0 %v1221, 16
  %v1253 = vpop.permute.xlu0 %1252
  %1254 = vrot.lane.b32.xlu0 %v1223, 16
  %v1255 = vpop.permute.xlu0 %1254
  %1256 = vrot.lane.b32.xlu0 %v1225, 16
  %v1257 = vpop.permute.xlu0 %1256
  %1258 = vrot.lane.b32.xlu0 %v1227, 16
  %v1259 = vpop.permute.xlu0 %1258
  %1260 = vrot.lane.b32.xlu0 %v1229, 16
  %v1261 = vpop.permute.xlu0 %1260
  %1262 = vrot.lane.b32.xlu0 %v1231, 16
  %v1263 = vpop.permute.xlu0 %1262
  %1264 = vrot.lane.b32.xlu0 %v1233, 16
  %v1265 = vpop.permute.xlu0 %1264
  %v1282 = vsel %vm499, %v1097, %v1155
  %v1283 = vsel %vm499, %v1090, %v1157
  %v1284 = vsel %vm499, %v1091, %v1159
  %v1285 = vsel %vm499, %v1092, %v1161
  %v1286 = vsel %vm499, %v1093, %v1163
  %v1287 = vsel %vm499, %v1094, %v1165
  %v1288 = vsel %vm499, %v1095, %v1167
  %v1289 = vsel %vm499, %v1096, %v1169
  %v1290 = vsel %vm499, %v1105, %v1171
  %v1291 = vsel %vm499, %v1098, %v1173
  %v1292 = vsel %vm499, %v1099, %v1175
  %v1293 = vsel %vm499, %v1100, %v1177
  %v1294 = vsel %vm499, %v1101, %v1179
  %v1295 = vsel %vm499, %v1102, %v1181
  %v1296 = vsel %vm499, %v1103, %v1183
  %v1297 = vsel %vm499, %v1104, %v1185
  %vm1298 = vcmask 130048
  %v1299 = vsel %vm1298, %v1282, %v1235
  %v1300 = vsel %vm1298, %v1283, %v1237
  %v1301 = vsel %vm1298, %v1284, %v1239
  %v1302 = vsel %vm1298, %v1285, %v1241
  %v1303 = vsel %vm1298, %v1286, %v1243
  %v1304 = vsel %vm1298, %v1287, %v1245
  %v1305 = vsel %vm1298, %v1288, %v1247
  %v1306 = vsel %vm1298, %v1289, %v1249
  %v1307 = vsel %vm1298, %v1290, %v1251
  %v1308 = vsel %vm1298, %v1291, %v1253
  %v1309 = vsel %vm1298, %v1292, %v1255
  %v1310 = vsel %vm1298, %v1293, %v1257
  %v1311 = vsel %vm1298, %v1294, %v1259
  %v1312 = vsel %vm1298, %v1295, %v1261
  %v1313 = vsel %vm1298, %v1296, %v1263
  %v1314 = vsel %vm1298, %v1297, %v1265
  %1331 = vrot.lane.b32.xlu0 %v1300, 24
  %v1332 = vpop.permute.xlu0 %1331
  %1333 = vrot.lane.b32.xlu0 %v1301, 24
  %v1334 = vpop.permute.xlu0 %1333
  %1335 = vrot.lane.b32.xlu0 %v1302, 24
  %v1336 = vpop.permute.xlu0 %1335
  %1337 = vrot.lane.b32.xlu0 %v1303, 24
  %v1338 = vpop.permute.xlu0 %1337
  %1339 = vrot.lane.b32.xlu0 %v1304, 24
  %v1340 = vpop.permute.xlu0 %1339
  %1341 = vrot.lane.b32.xlu0 %v1305, 24
  %v1342 = vpop.permute.xlu0 %1341
  %1343 = vrot.lane.b32.xlu0 %v1306, 24
  %v1344 = vpop.permute.xlu0 %1343
  %1345 = vrot.lane.b32.xlu0 %v1299, 24
  %v1346 = vpop.permute.xlu0 %1345
  %1347 = vrot.lane.b32.xlu0 %v1308, 24
  %v1348 = vpop.permute.xlu0 %1347
  %1349 = vrot.lane.b32.xlu0 %v1309, 24
  %v1350 = vpop.permute.xlu0 %1349
  %1351 = vrot.lane.b32.xlu0 %v1310, 24
  %v1352 = vpop.permute.xlu0 %1351
  %1353 = vrot.lane.b32.xlu0 %v1311, 24
  %v1354 = vpop.permute.xlu0 %1353
  %1355 = vrot.lane.b32.xlu0 %v1312, 24
  %v1356 = vpop.permute.xlu0 %1355
  %1357 = vrot.lane.b32.xlu0 %v1313, 24
  %v1358 = vpop.permute.xlu0 %1357
  %1359 = vrot.lane.b32.xlu0 %v1314, 24
  %v1360 = vpop.permute.xlu0 %1359
  %1361 = vrot.lane.b32.xlu0 %v1307, 24
  %v1362 = vpop.permute.xlu0 %1361
  %1379 = vrot.lane.b32.xlu0 %v1301, 48
  %v1380 = vpop.permute.xlu0 %1379
  %1381 = vrot.lane.b32.xlu0 %v1302, 48
  %v1382 = vpop.permute.xlu0 %1381
  %1383 = vrot.lane.b32.xlu0 %v1303, 48
  %v1384 = vpop.permute.xlu0 %1383
  %1385 = vrot.lane.b32.xlu0 %v1304, 48
  %v1386 = vpop.permute.xlu0 %1385
  %1387 = vrot.lane.b32.xlu0 %v1305, 48
  %v1388 = vpop.permute.xlu0 %1387
  %1389 = vrot.lane.b32.xlu0 %v1306, 48
  %v1390 = vpop.permute.xlu0 %1389
  %1391 = vrot.lane.b32.xlu0 %v1299, 48
  %v1392 = vpop.permute.xlu0 %1391
  %1393 = vrot.lane.b32.xlu0 %v1300, 48
  %v1394 = vpop.permute.xlu0 %1393
  %1395 = vrot.lane.b32.xlu0 %v1309, 48
  %v1396 = vpop.permute.xlu0 %1395
  %1397 = vrot.lane.b32.xlu0 %v1310, 48
  %v1398 = vpop.permute.xlu0 %1397
  %1399 = vrot.lane.b32.xlu0 %v1311, 48
  %v1400 = vpop.permute.xlu0 %1399
  %1401 = vrot.lane.b32.xlu0 %v1312, 48
  %v1402 = vpop.permute.xlu0 %1401
  %1403 = vrot.lane.b32.xlu0 %v1313, 48
  %v1404 = vpop.permute.xlu0 %1403
  %1405 = vrot.lane.b32.xlu0 %v1314, 48
  %v1406 = vpop.permute.xlu0 %1405
  %1407 = vrot.lane.b32.xlu0 %v1307, 48
  %v1408 = vpop.permute.xlu0 %1407
  %1409 = vrot.lane.b32.xlu0 %v1308, 48
  %v1410 = vpop.permute.xlu0 %1409
  %v1427 = vsel %vm645, %v1299, %v1332
  %v1428 = vsel %vm645, %v1300, %v1334
  %v1429 = vsel %vm645, %v1301, %v1336
  %v1430 = vsel %vm645, %v1302, %v1338
  %v1431 = vsel %vm645, %v1303, %v1340
  %v1432 = vsel %vm645, %v1304, %v1342
  %v1433 = vsel %vm645, %v1305, %v1344
  %v1434 = vsel %vm645, %v1306, %v1346
  %v1435 = vsel %vm645, %v1307, %v1348
  %v1436 = vsel %vm645, %v1308, %v1350
  %v1437 = vsel %vm645, %v1309, %v1352
  %v1438 = vsel %vm645, %v1310, %v1354
  %v1439 = vsel %vm645, %v1311, %v1356
  %v1440 = vsel %vm645, %v1312, %v1358
  %v1441 = vsel %vm645, %v1313, %v1360
  %v1442 = vsel %vm645, %v1314, %v1362
  %vm1443 = vcmask 392192
  %v1444 = vsel %vm1443, %v1427, %v1380
  %v1445 = vsel %vm1443, %v1428, %v1382
  %v1446 = vsel %vm1443, %v1429, %v1384
  %v1447 = vsel %vm1443, %v1430, %v1386
  %v1448 = vsel %vm1443, %v1431, %v1388
  %v1449 = vsel %vm1443, %v1432, %v1390
  %v1450 = vsel %vm1443, %v1433, %v1392
  %v1451 = vsel %vm1443, %v1434, %v1394
  %v1452 = vsel %vm1443, %v1435, %v1396
  %v1453 = vsel %vm1443, %v1436, %v1398
  %v1454 = vsel %vm1443, %v1437, %v1400
  %v1455 = vsel %vm1443, %v1438, %v1402
  %v1456 = vsel %vm1443, %v1439, %v1404
  %v1457 = vsel %vm1443, %v1440, %v1406
  %v1458 = vsel %vm1443, %v1441, %v1408
  %v1459 = vsel %vm1443, %v1442, %v1410
  %vm1460 = vcmask 588800
  %v1462 = vsel %vm1460, %v1444, 0
  %v1465 = vsel %vm1460, %v1445, 0
  %v1468 = vsel %vm1460, %v1446, 0
  %v1471 = vsel %vm1460, %v1447, 0
  %v1474 = vsel %vm1460, %v1448, 0
  %v1477 = vsel %vm1460, %v1449, 0
  %v1480 = vsel %vm1460, %v1450, 0
  %v1483 = vsel %vm1460, %v1451, 0
  %v1486 = vsel %vm1460, %v1452, 0
  %v1489 = vsel %vm1460, %v1453, 0
  %v1492 = vsel %vm1460, %v1454, 0
  %v1495 = vsel %vm1460, %v1455, 0
  %v1498 = vsel %vm1460, %v1456, 0
  %v1501 = vsel %vm1460, %v1457, 0
  %v1504 = vsel %vm1460, %v1458, 0
  %v1507 = vsel %vm1460, %v1459, 0
  %1509 = vmatprep.subr.mxu0 0.0
  %1510 = vmatpush1.msra.mxu0 %v1033
  %1511 = vmatprep.subr.mxu0 0.0
  %1512 = vmatpush1.msra.mxu0 %v1034
  %1513 = vmatprep.subr.mxu0 0.0
  %1514 = vmatpush1.msra.mxu0 %v1035
  %1515 = vmatprep.subr.mxu0 0.0
  %1516 = vmatpush1.msra.mxu0 %v1036
  %1517 = vmatprep.subr.mxu0 0.0
  %1518 = vmatpush1.msra.mxu0 %v1037
  %1519 = vmatprep.subr.mxu0 0.0
  %1520 = vmatpush1.msra.mxu0 %v1038
  %1521 = vmatprep.subr.mxu0 0.0
  %1522 = vmatpush1.msra.mxu0 %v1039
  %1523 = vmatprep.subr.mxu0 0.0
  %1524 = vmatpush1.msra.mxu0 %v1040
  %1525 = vmatprep.subr.mxu0 0.0
  %1526 = vmatpush1.msra.mxu0 %v1041
  %1527 = vmatprep.subr.mxu0 0.0
  %1528 = vmatpush1.msra.mxu0 0.0
  %1529 = vmatprep.subr.mxu0 0.0
  %1530 = vmatpush1.msra.mxu0 0.0
  %1531 = vmatprep.subr.mxu0 0.0
  %1532 = vmatpush1.msra.mxu0 0.0
  %1533 = vmatprep.subr.mxu0 0.0
  %1534 = vmatpush1.msra.mxu0 0.0
  %1535 = vmatprep.subr.mxu0 0.0
  %1536 = vmatpush1.msra.mxu0 0.0
  %1537 = vmatprep.subr.mxu0 0.0
  %1538 = vmatpush1.msra.mxu0 0.0
  %1539 = vmatprep.subr.mxu0 0.0
  %1540 = vmatpush1.msra.mxu0 0.0
  %1541 = vmatprep.subr.mxu0 0.0
  %1542 = vmatpush1.msra.mxu0 0.0
  %1543 = vmatprep.subr.mxu0 0.0
  %1544 = vmatpush1.msra.mxu0 0.0
  %1545 = vmatprep.subr.mxu0 0.0
  %1546 = vmatpush1.msra.mxu0 0.0
  %1547 = vmatprep.subr.mxu0 0.0
  %1548 = vmatpush1.msra.mxu0 0.0
  %1549 = vmatprep.subr.mxu0 0.0
  %1550 = vmatpush1.msra.mxu0 0.0
  %1551 = vmatprep.subr.mxu0 0.0
  %1552 = vmatpush1.msra.mxu0 0.0
  %1553 = vmatprep.subr.mxu0 0.0
  %1554 = vmatpush1.msra.mxu0 0.0
  %1555 = vmatprep.subr.mxu0 0.0
  %1556 = vmatpush1.msra.mxu0 0.0
  %1557 = vmatprep.subr.mxu0 0.0
  %1558 = vmatpush1.msra.mxu0 0.0
  %1559 = vmatprep.subr.mxu0 0.0
  %1560 = vmatpush1.msra.mxu0 0.0
  %1561 = vmatprep.subr.mxu0 0.0
  %1562 = vmatpush1.msra.mxu0 0.0
  %1563 = vmatprep.subr.mxu0 0.0
  %1564 = vmatpush1.msra.mxu0 0.0
  %1565 = vmatprep.subr.mxu0 0.0
  %1566 = vmatpush1.msra.mxu0 0.0
  %1567 = vmatprep.subr.mxu0 0.0
  %1568 = vmatpush1.msra.mxu0 0.0
  %1569 = vmatprep.subr.mxu0 0.0
  %1570 = vmatpush1.msra.mxu0 0.0
  %1571 = vmatprep.subr.mxu0 0.0
  %1572 = vmatpush1.msra.mxu0 0.0
  %1573 = vmatprep.mubr.f32.mxu0 0.0
  %1574 = vmatmul.mubr.f32.gmra.mrb[0].mxu0 %v1462
  %v1575 = vpop.f32.mrb[0].mxu0
  %v1576 = vadd.f32 0.0, %v1575
  %v1577 = vpop.f32.mrb[0].mxu0
  %1578 = vmatprep.mubr.f32.mxu0 0.0
  %1579 = vmatmul.mubr.f32.gmra.mrb[0].mxu0 %v1465
  %v1580 = vpop.f32.mrb[0].mxu0
  %v1581 = vadd.f32 0.0, %v1580
  %v1582 = vpop.f32.mrb[0].mxu0
  %1583 = vmatprep.mubr.f32.mxu0 0.0
  %1584 = vmatmul.mubr.f32.gmra.mrb[0].mxu0 %v1468
  %v1585 = vpop.f32.mrb[0].mxu0
  %v1586 = vadd.f32 0.0, %v1585
  %v1587 = vpop.f32.mrb[0].mxu0
  %1588 = vmatprep.mubr.f32.mxu0 0.0
  %1589 = vmatmul.mubr.f32.gmra.mrb[0].mxu0 %v1471
  %v1590 = vpop.f32.mrb[0].mxu0
  %v1591 = vadd.f32 0.0, %v1590
  %v1592 = vpop.f32.mrb[0].mxu0
  %1593 = vmatprep.mubr.f32.mxu0 0.0
  %1594 = vmatmul.mubr.f32.gmra.mrb[0].mxu0 %v1474
  %v1595 = vpop.f32.mrb[0].mxu0
  %v1596 = vadd.f32 0.0, %v1595
  %v1597 = vpop.f32.mrb[0].mxu0
  %1598 = vmatprep.mubr.f32.mxu0 0.0
  %1599 = vmatmul.mubr.f32.gmra.mrb[0].mxu0 %v1477
  %v1600 = vpop.f32.mrb[0].mxu0
  %v1601 = vadd.f32 0.0, %v1600
  %v1602 = vpop.f32.mrb[0].mxu0
  %1603 = vmatprep.mubr.f32.mxu0 0.0
  %1604 = vmatmul.mubr.f32.gmra.mrb[0].mxu0 %v1480
  %v1605 = vpop.f32.mrb[0].mxu0
  %v1606 = vadd.f32 0.0, %v1605
  %v1607 = vpop.f32.mrb[0].mxu0
  %1608 = vmatprep.mubr.f32.mxu0 0.0
  %1609 = vmatmul.mubr.f32.gmra.mrb[0].mxu0 %v1483
  %v1610 = vpop.f32.mrb[0].mxu0
  %v1611 = vadd.f32 0.0, %v1610
  %v1612 = vpop.f32.mrb[0].mxu0
  %1613 = vmatprep.mubr.f32.mxu0 0.0
  %1614 = vmatmul.mubr.f32.gmra.mrb[0].mxu0 %v1486
  %v1615 = vpop.f32.mrb[0].mxu0
  %v1616 = vadd.f32 0.0, %v1615
  %v1617 = vpop.f32.mrb[0].mxu0
  %1618 = vmatprep.mubr.f32.mxu0 0.0
  %1619 = vmatmul.mubr.f32.gmra.mrb[0].mxu0 %v1489
  %v1620 = vpop.f32.mrb[0].mxu0
  %v1621 = vadd.f32 0.0, %v1620
  %v1622 = vpop.f32.mrb[0].mxu0
  %1623 = vmatprep.mubr.f32.mxu0 0.0
  %1624 = vmatmul.mubr.f32.gmra.mrb[0].mxu0 %v1492
  %v1625 = vpop.f32.mrb[0].mxu0
  %v1626 = vadd.f32 0.0, %v1625
  %v1627 = vpop.f32.mrb[0].mxu0
  %1628 = vmatprep.mubr.f32.mxu0 0.0
  %1629 = vmatmul.mubr.f32.gmra.mrb[0].mxu0 %v1495
  %v1630 = vpop.f32.mrb[0].mxu0
  %v1631 = vadd.f32 0.0, %v1630
  %v1632 = vpop.f32.mrb[0].mxu0
  %1633 = vmatprep.mubr.f32.mxu0 0.0
  %1634 = vmatmul.mubr.f32.gmra.mrb[0].mxu0 %v1498
  %v1635 = vpop.f32.mrb[0].mxu0
  %v1636 = vadd.f32 0.0, %v1635
  %v1637 = vpop.f32.mrb[0].mxu0
  %1638 = vmatprep.mubr.f32.mxu0 0.0
  %1639 = vmatmul.mubr.f32.gmra.mrb[0].mxu0 %v1501
  %v1640 = vpop.f32.mrb[0].mxu0
  %v1641 = vadd.f32 0.0, %v1640
  %v1642 = vpop.f32.mrb[0].mxu0
  %1643 = vmatprep.mubr.f32.mxu0 0.0
  %1644 = vmatmul.mubr.f32.gmra.mrb[0].mxu0 %v1504
  %v1645 = vpop.f32.mrb[0].mxu0
  %v1646 = vadd.f32 0.0, %v1645
  %v1647 = vpop.f32.mrb[0].mxu0
  %1648 = vmatprep.mubr.f32.mxu0 0.0
  %1649 = vmatmul.mubr.f32.gmra.mrb[0].mxu0 %v1507
  %v1650 = vpop.f32.mrb[0].mxu0
  %v1651 = vadd.f32 0.0, %v1650
  %v1652 = vpop.f32.mrb[0].mxu0
  %1653 = vdwg.mxu0
  %1654 = vxpose.xlu0.b32.start [1/16] %v1576, 128
  %1655 = vxpose.xlu0.b32.cont [2/16] %v1581, 128
  %1656 = vxpose.xlu0.b32.cont [3/16] %v1586, 128
  %1657 = vxpose.xlu0.b32.cont [4/16] %v1591, 128
  %1658 = vxpose.xlu0.b32.cont [5/16] %v1596, 128
  %1659 = vxpose.xlu0.b32.cont [6/16] %v1601, 128
  %1660 = vxpose.xlu0.b32.cont [7/16] %v1606, 128
  %1661 = vxpose.xlu0.b32.cont [8/16] %v1611, 128
  %1662 = vxpose.xlu0.b32.cont [9/16] %v1616, 128
  %1663 = vxpose.xlu0.b32.cont [10/16] %v1621, 128
  %1664 = vxpose.xlu0.b32.cont [11/16] %v1626, 128
  %1665 = vxpose.xlu0.b32.cont [12/16] %v1631, 128
  %1666 = vxpose.xlu0.b32.cont [13/16] %v1636, 128
  %1667 = vxpose.xlu0.b32.cont [14/16] %v1641, 128
  %1668 = vxpose.xlu0.b32.cont [15/16] %v1646, 128
  %1669 = vxpose.xlu0.b32.end [16/16] %v1651, 128
  %v1670 = vpop.trf.xlu0
  %v1671 = vpop.trf.xlu0
  %v1672 = vpop.trf.xlu0
  %v1673 = vpop.trf.xlu0
  %v1674 = vpop.trf.xlu0
  %v1675 = vpop.trf.xlu0
  %v1676 = vpop.trf.xlu0
  %v1677 = vpop.trf.xlu0
  %v1678 = vpop.trf.xlu0
  %v1679 = vpop.trf.xlu0
  %v1680 = vpop.trf.xlu0
  %v1681 = vpop.trf.xlu0
  %v1682 = vpop.trf.xlu0
  %v1683 = vpop.trf.xlu0
  %v1684 = vpop.trf.xlu0
  %v1685 = vpop.trf.xlu0
  %1686 = vadd.xlane.f32.xlu0 %v1670
  %v1687 = vpop.xlane.xlu0 %1686
  %v1688 = vmul.f32 %v1687, 0.0078125
  %v1689 = vmul.f32 %v1670, %v1670
  %1690 = vadd.xlane.f32.xlu0 %v1689
  %v1691 = vpop.xlane.xlu0 %1690
  %v1692 = vmul.f32 %v1691, 0.0078125
  %v1693 = vmul.f32 %v1688, %v1688
  %v1694 = vsub.f32 %v1692, %v1693
  %v1695 = vadd.f32 %v1694, 1e-05
  %v1696 = vrsqrt.pop %v1695
  %v1697 = vsub.f32 %v1670, %v1688
  %v1698 = vld [vmem:[%s5] sm:$0xff]
  %v1699 = vmul.f32 %v1696, %v1698
  %1701 = vset.pattern.permute.xlu0 0
  %1702 = vperm.xlu0 %1701, %v1699
  %v1703 = vpop.permute.xlu0 %1702
  %v1705 = vmul.f32 %v1697, %v1703
  %v1706 = vld [vmem:[%s6] sm:$0xff]
  %1708 = vset.pattern.permute.xlu0 0
  %1709 = vperm.xlu0 %1708, %v1706
  %v1710 = vpop.permute.xlu0 %1709
  %v1712 = vadd.f32 %v1705, %v1710
  %v1713 = vmax.f32 %v1712, 0.0
  %1714 = vst [vmem:[%s7] sm:$0xff] %v1713
  // Predicated region
  $region30: #{block_forward.1} parent=0 // pred_check
    _
  $region31: #{block_forward.1} parent=0 // pred_check_branch
    %1716 = sbr.rel (0) target = $region33
  $region32: #{block_forward.1} parent=0 // pred_region
    _
  $region33: #{block_forward.1} parent=0 // pred_fallthru
    _
  // Predicated region
  $region34: #{block_forward.1} parent=0 // pred_check
    _
  $region35: #{block_forward.1} parent=0 // pred_check_branch
    %1718 = sbr.rel (0) target = $region37
  $region36: #{block_forward.1} parent=0 // pred_region
    _
  $region37: #{block_forward.1} parent=0 // pred_fallthru
    _

</llo_original>
